<compile_context>
chip_gen: v5e
topology: v5e:2x2
jax: 0.10.0
libtpu: 0.0.40
codegen_flags: <defaults>
</compile_context>

<pallas_src>
import jax
import jax.numpy as jnp
from jax.experimental import pallas as pl
from jax.experimental.pallas import tpu as pltpu

INPUT_SIZE = 1000    # K
OUTPUT_SIZE = 500    # N


def _detect_n_shards() -> int:
    """2 output shards on v7x (2 TensorCores/chip), else 1.

    Hoisted to import time (single host-side device query, never in the
    per-call / traced path).  Falls back to 1 shard on any ambiguity.
    """
    try:
        kind = jax.devices()[0].device_kind.lower().replace(" ", "")
    except Exception:
        return 1
    return 2 if any(tag in kind for tag in ("v7", "tpu7", "7x")) else 1


N_SHARDS = _detect_n_shards()


def linear_kernel(x_ref, w_ref, b_ref, o_ref):
    # x_ref: (TB, K) f32, w_ref: (K, NBLK) bf16, b_ref: (1, NBLK) f32,
    # o_ref: (TB, NBLK) f32.  bf16 x bf16 MXU matmul, f32 accumulate, f32 bias.
    # On the v7x 2-shard path the last N block is partial (500 % 256 != 0):
    # out-of-bounds weight/bias lanes read garbage, but each output column
    # depends only on its own weight column, and OOB output writes are masked,
    # so in-bounds results are unaffected.
    x_bf = x_ref[...].astype(jnp.bfloat16)
    acc = jnp.dot(x_bf, w_ref[...], preferred_element_type=jnp.float32)
    o_ref[...] = (acc + b_ref[...]).astype(o_ref.dtype)


def prepare_params(weight, bias):
    """One-time parameter prep (hoisted out of the per-call path).

    weight: (out, in) torch layout, f32.  bias: (out,) f32.
    Returns:
      w_kn : (in, out) bf16  == weight.T  (halves the dominant weight DMA)
      b_row: (1, out) f32
    """
    w_kn = jnp.asarray(weight).T.astype(jnp.bfloat16)
    b_row = jnp.asarray(bias).astype(jnp.float32).reshape(1, -1)
    return w_kn, b_row


def small_model_forward(x, w_kn, b_row):
    """x: (B, in) f32; w_kn/b_row from prepare_params(). Returns (B, out) f32."""
    B, K = x.shape
    N = w_kn.shape[1]                       # 500

    # N tiling: single full (lane-dense-enough) block normally; 2 x 256 on v7x.
    if N_SHARDS > 1:
        n_blk = ((pl.cdiv(N, N_SHARDS) + 127) // 128) * 128   # 256
        n_sem = pltpu.CORE_PARALLEL                           # real 2-TC split
    else:
        n_blk = N                                             # full dim: legal
        n_sem = pltpu.ARBITRARY
    n_grid = pl.cdiv(N, n_blk)

    # Batch tiling: full block for small B; 256-row tiles for large B so VMEM
    # (esp. v7x's 64 MiB) and the default scoped-VMEM limit are never at risk.
    tb = B if B <= 256 else 256
    b_grid = pl.cdiv(B, tb)

    cost = pl.CostEstimate(
        flops=2 * B * K * N,
        transcendentals=0,
        bytes_accessed=(B * K * 4) + (K * N * 2) + (N * 4) + (B * N * 4),
    )

    # Grid: N OUTER, batch INNER -> the weight block stays VMEM-resident across
    # all batch steps (it is only re-DMA'd when the N block index changes).
    return pl.pallas_call(
        linear_kernel,
        out_shape=jax.ShapeDtypeStruct((B, N), jnp.float32),
        grid=(n_grid, b_grid),
        in_specs=[
            pl.BlockSpec((tb, K), lambda j, b: (b, 0)),      # x batch tile
            pl.BlockSpec((K, n_blk), lambda j, b: (0, j)),   # weight N shard
            pl.BlockSpec((1, n_blk), lambda j, b: (0, j)),   # bias N shard
        ],
        out_specs=pl.BlockSpec((tb, n_blk), lambda j, b: (b, j)),
        compiler_params=pltpu.CompilerParams(
            dimension_semantics=(n_sem, pltpu.PARALLEL),
        ),
        cost_estimate=cost,
    )(x, w_kn, b_row)


if __name__ == "__main__":
    key = jax.random.PRNGKey(0)
    kx, kw, kb = jax.random.split(key, 3)

    B = 8
    bound = 1.0 / (INPUT_SIZE ** 0.5)   # torch.nn.Linear default init range
    weight = jax.random.uniform(kw, (OUTPUT_SIZE, INPUT_SIZE), jnp.float32,
                                -bound, bound)
    bias = jax.random.uniform(kb, (OUTPUT_SIZE,), jnp.float32, -bound, bound)
    x = jax.random.normal(kx, (B, INPUT_SIZE), jnp.float32)

    # Hoisted, one-time param prep (transpose + bf16 cast).
    w_kn, b_row = prepare_params(weight, bias)

    fwd = jax.jit(small_model_forward)
    out = jax.block_until_ready(fwd(x, w_kn, b_row))
    assert out.shape == (B, OUTPUT_SIZE)
    assert out.dtype == jnp.float32

    # Tight check: kernel vs an identically-quantized (bf16 x, bf16 W) reference.
    ref_q = jnp.dot(x.astype(jnp.bfloat16), w_kn,
                    preferred_element_type=jnp.float32) + bias
    assert jnp.allclose(out, ref_q, atol=1e-3, rtol=1e-3)

    # Loose check: vs full-f32 torch.nn.Linear semantics (bf16 weight storage
    # gives ~1e-2-level deviation over the K=1000 contraction).
    ref = x @ weight.T + bias
    assert jnp.allclose(out, ref, atol=3e-2, rtol=3e-2)

    print("KERNEL_OK")
</pallas_src>

<mosaic_0001>
module attributes {stable_mosaic.version = 11 : i64} {
  func.func @linear_kernel(%arg0: i32, %arg1: i32, %arg2: memref<8x1000xf32, #tpu.memory_space<vmem>>, %arg3: memref<1000x500xbf16, #tpu.memory_space<vmem>>, %arg4: memref<1x500xf32, #tpu.memory_space<vmem>>, %arg5: memref<8x500xf32, #tpu.memory_space<vmem>>) attributes {dimension_semantics = [#tpu.dimension_semantics<arbitrary>, #tpu.dimension_semantics<parallel>], iteration_bounds = array<i64: 1, 1>, scalar_prefetch = 0 : i64, scratch_operands = 0 : i64, tpu.core_type = #tpu.core_type<tc>, window_params = [{transform_indices = @transform_0, window_bounds = array<i64: 8, 1000>}, {transform_indices = @transform_1, window_bounds = array<i64: 1000, 500>}, {transform_indices = @transform_2, window_bounds = array<i64: 1, 500>}, {transform_indices = @transform_3, window_bounds = array<i64: 8, 500>}]} {
    %c0 = arith.constant 0 : index
    %c0_0 = arith.constant 0 : index
    %0 = vector.load %arg2[%c0, %c0_0] : memref<8x1000xf32, #tpu.memory_space<vmem>>, vector<8x1000xf32>
    %1 = arith.truncf %0 : vector<8x1000xf32> to vector<8x1000xbf16>
    %c0_1 = arith.constant 0 : index
    %c0_2 = arith.constant 0 : index
    %2 = vector.load %arg3[%c0_1, %c0_2] : memref<1000x500xbf16, #tpu.memory_space<vmem>>, vector<1000x500xbf16>
    %cst = arith.constant dense<0.000000e+00> : vector<8x500xf32>
    %3 = tpu.matmul %1, %2, %cst {dimension_numbers = #tpu.dot_dimension_numbers<[1], [0], [0], [1], [0, 0, 1, 1], [], []>} : vector<8x1000xbf16>, vector<1000x500xbf16>, vector<8x500xf32> -> vector<8x500xf32>
    %c0_3 = arith.constant 0 : index
    %c0_4 = arith.constant 0 : index
    %4 = vector.load %arg4[%c0_3, %c0_4] : memref<1x500xf32, #tpu.memory_space<vmem>>, vector<1x500xf32>
    %5 = vector.broadcast %4 : vector<1x500xf32> to vector<8x500xf32>
    %6 = arith.addf %3, %5 : vector<8x500xf32>
    %c0_5 = arith.constant 0 : index
    %c0_6 = arith.constant 0 : index
    %7 = vector.load %arg5[%c0_5, %c0_6] : memref<8x500xf32, #tpu.memory_space<vmem>>, vector<8x500xf32>
    tpu.vector_store %arg5[%c0_5, %c0_6], %6 {strides = array<i32>} : memref<8x500xf32, #tpu.memory_space<vmem>>, vector<8x500xf32>,
    return
  }
  func.func @transform_0(%arg0: i32, %arg1: i32) -> (i32, i32) {
    %c0_i32 = arith.constant 0 : i32
    %c0_i32_0 = arith.constant 0 : i32
    return %arg1, %c0_i32 : i32, i32
  }
  func.func @transform_1(%arg0: i32, %arg1: i32) -> (i32, i32) {
    %c0_i32 = arith.constant 0 : i32
    %c0_i32_0 = arith.constant 0 : i32
    return %c0_i32, %arg0 : i32, i32
  }
  func.func @transform_2(%arg0: i32, %arg1: i32) -> (i32, i32) {
    %c0_i32 = arith.constant 0 : i32
    %c0_i32_0 = arith.constant 0 : i32
    return %c0_i32, %arg0 : i32, i32
  }
  func.func @transform_3(%arg0: i32, %arg1: i32) -> (i32, i32) {
    %c0_i32 = arith.constant 0 : i32
    return %arg1, %arg0 : i32, i32
  }
}

</mosaic_0001>

<llo_original>
// kernel: small_model_forward.1
$region0: #{small_model_forward.1}
  #allocation0 [shape = 'u32[]', space=smem, size = 0x4, offset = 0x4, fixed_abs, tag = 'smem constant byte address 0x4 - core index']
  #allocation1 [shape = 'u32[72,128]{1,0:T(1,128)}', space=vmem, size = 0x9000, scoped, tag = 'internal scratch']
  %s0 = inlined_call_operand.hbm [shape: f32[8,1000], index: 0, kind: input, shape index: {}]
  %s1 = inlined_call_operand.hbm [shape: bf16[1000,500], index: 1, kind: input, shape index: {}]
  %s2 = inlined_call_operand.hbm [shape: f32[1,500], index: 2, kind: input, shape index: {}]
  %s3 = inlined_call_operand.hbm [shape: f32[8,500], index: 3, kind: output, shape index: {}]
  %s4 = sld [smem:[#allocation0]]
  $region34: #{small_model_forward.1} parent=0
    _
  %s6 = ssub.s32 1, %s4
  %s7 = scalar_select 0, %s6, %s4
  $region1: #{small_model_forward.1} parent=0
    #allocation2 [shape = 'u8[32768]{0}', space=vmem, size = 0x8000, scoped, tag = 'input window, operand 0, single buffered']
    #allocation3 [shape = 's32[1]{0}', space=sflag, size = 0x4, scoped, tag = 'scoped memory for small_model_forward.1']
    #allocation4 [shape = 's32[1]{0}', space=sflag, size = 0x4, scoped, tag = 'scoped memory for small_model_forward.1']
    #allocation5 [shape = 'u8[1024000]{0}', space=vmem, size = 0xfa000, scoped, tag = 'input window, operand 1, single buffered']
    #allocation6 [shape = 's32[1]{0}', space=sflag, size = 0x4, scoped, tag = 'scoped memory for small_model_forward.1']
    #allocation7 [shape = 'u8[2048]{0}', space=vmem, size = 0x800, scoped, tag = 'input window, operand 2, single buffered']
    #allocation8 [shape = 'u8[16384]{0}', space=vmem, size = 0x4000, scoped, tag = 'output window, operand 0, single buffered']
    %8 = vsyncpa [#allocation3], 0
    %9 = vsyncpa [#allocation6], 0
    %10 = vsyncpa [#allocation4], 0
    // Predicated region
    $region2: #{small_model_forward.1} parent=1 // pred_check
      _
    $region3: #{small_model_forward.1} parent=1 // pred_check_branch
      %12 = sbr.rel (0) target = $region5
    $region4: #{small_model_forward.1} parent=1 // pred_region
      %14 = vsyncadd [#allocation3], 0
      %s16 = sshll.u32 %s0, 4
      %s17 = int_to_ptr.hbm [resolvable:$true] %s16
      %s18 = sshll.u32 [#allocation2], 4
      %s19 = int_to_ptr.vmem [resolvable:$true] %s18
      %21 = dma.hbm_to_vmem [thread:$0]  %s17, 1024, %s19, [#allocation3]
    $region5: #{small_model_forward.1} parent=1 // pred_fallthru
      _
    // Predicated region
    $region6: #{small_model_forward.1} parent=1 // pred_check
      _
    $region7: #{small_model_forward.1} parent=1 // pred_check_branch
      %23 = sbr.rel (0) target = $region9
    $region8: #{small_model_forward.1} parent=1 // pred_region
      %25 = vsyncadd [#allocation6], 0
      %s26 = sshll.u32 %s1, 4
      %s27 = int_to_ptr.hbm [resolvable:$true] %s26
      %s28 = sshll.u32 [#allocation5], 4
      %s29 = int_to_ptr.vmem [resolvable:$true] %s28
      %34 = dma.hbm_to_vmem [thread:$0]  %s27, 32000, %s29, [#allocation6], 256, 256, 16
    $region9: #{small_model_forward.1} parent=1 // pred_fallthru
      _
    // Predicated region
    $region10: #{small_model_forward.1} parent=1 // pred_check
      _
    $region11: #{small_model_forward.1} parent=1 // pred_check_branch
      %36 = sbr.rel (0) target = $region13
    $region12: #{small_model_forward.1} parent=1 // pred_region
      %38 = vsyncadd [#allocation6], 0
      %s40 = sshll.u32 %s2, 4
      %s41 = int_to_ptr.hbm [resolvable:$true] %s40
      %s42 = sshll.u32 [#allocation7], 4
      %s43 = int_to_ptr.vmem [resolvable:$true] %s42
      %45 = dma.hbm_to_vmem [thread:$0]  %s41, 64, %s43, [#allocation6]
    $region13: #{small_model_forward.1} parent=1 // pred_fallthru
      _
    // Predicated region
    $region14: #{small_model_forward.1} parent=1 // pred_check
      _
    $region15: #{small_model_forward.1} parent=1 // pred_check_branch
      %47 = sbr.rel (0) target = $region17
    $region16: #{small_model_forward.1} parent=1 // pred_region
      %49 = dma.done [#allocation3], 1024
    $region17: #{small_model_forward.1} parent=1 // pred_fallthru
      _
    // Predicated region
    $region18: #{small_model_forward.1} parent=1 // pred_check
      _
    $region19: #{small_model_forward.1} parent=1 // pred_check_branch
      %51 = sbr.rel (0) target = $region21
    $region20: #{small_model_forward.1} parent=1 // pred_region
      %53 = dma.done [#allocation6], 32000
    $region21: #{small_model_forward.1} parent=1 // pred_fallthru
      _
    // Predicated region
    $region22: #{small_model_forward.1} parent=1 // pred_check
      _
    $region23: #{small_model_forward.1} parent=1 // pred_check_branch
      %55 = sbr.rel (0) target = $region25
    $region24: #{small_model_forward.1} parent=1 // pred_region
      %57 = dma.done [#allocation6], 64
    $region25: #{small_model_forward.1} parent=1 // pred_fallthru
      _
    %v59 = vld [vmem:[#allocation2] sm:$0xff]
    %v60 = vld [vmem:[#allocation2 + $0x8] sm:$0xff]
    %v61 = vld [vmem:[#allocation2 + $0x10] sm:$0xff]
    %v62 = vld [vmem:[#allocation2 + $0x18] sm:$0xff]
    %v63 = vld [vmem:[#allocation2 + $0x20] sm:$0xff]
    %v64 = vld [vmem:[#allocation2 + $0x28] sm:$0xff]
    %v65 = vld [vmem:[#allocation2 + $0x30] sm:$0xff]
    %v66 = vld [vmem:[#allocation2 + $0x38] sm:$0xff]
    %v67 = vpack.c.bf16 %v59, %v59
    %v68 = vpack.c.bf16 %v60, %v60
    %v69 = vpack.c.bf16 %v61, %v61
    %v70 = vpack.c.bf16 %v62, %v62
    %v71 = vpack.c.bf16 %v63, %v63
    %v72 = vpack.c.bf16 %v64, %v64
    %v73 = vpack.c.bf16 %v65, %v65
    %v74 = vpack.c.bf16 %v66, %v66
    %v75 = vld [vmem:[#allocation5] sm:$0xff]
    %v76 = vld [vmem:[#allocation5 + $0x8] sm:$0xff]
    %v77 = vld [vmem:[#allocation5 + $0x10] sm:$0xff]
    %v78 = vld [vmem:[#allocation5 + $0x18] sm:$0xff]
    %v79 = vld [vmem:[#allocation5 + $0x20] sm:$0xff]
    %v80 = vld [vmem:[#allocation5 + $0x28] sm:$0xff]
    %v81 = vld [vmem:[#allocation5 + $0x30] sm:$0xff]
    %v82 = vld [vmem:[#allocation5 + $0x38] sm:$0xff]
    %v83 = vld [vmem:[#allocation5 + $0x40] sm:$0xff]
    %v84 = vld [vmem:[#allocation5 + $0x48] sm:$0xff]
    %v85 = vld [vmem:[#allocation5 + $0x50] sm:$0xff]
    %v86 = vld [vmem:[#allocation5 + $0x58] sm:$0xff]
    %v87 = vld [vmem:[#allocation5 + $0x60] sm:$0xff]
    %v88 = vld [vmem:[#allocation5 + $0x68] sm:$0xff]
    %v89 = vld [vmem:[#allocation5 + $0x70] sm:$0xff]
    %v90 = vld [vmem:[#allocation5 + $0x78] sm:$0xff]
    %v91 = vld [vmem:[#allocation5 + $0x80] sm:$0xff]
    %v92 = vld [vmem:[#allocation5 + $0x88] sm:$0xff]
    %v93 = vld [vmem:[#allocation5 + $0x90] sm:$0xff]
    %v94 = vld [vmem:[#allocation5 + $0x98] sm:$0xff]
    %v95 = vld [vmem:[#allocation5 + $0xa0] sm:$0xff]
    %v96 = vld [vmem:[#allocation5 + $0xa8] sm:$0xff]
    %v97 = vld [vmem:[#allocation5 + $0xb0] sm:$0xff]
    %v98 = vld [vmem:[#allocation5 + $0xb8] sm:$0xff]
    %v99 = vld [vmem:[#allocation5 + $0xc0] sm:$0xff]
    %v100 = vld [vmem:[#allocation5 + $0xc8] sm:$0xff]
    %v101 = vld [vmem:[#allocation5 + $0xd0] sm:$0xff]
    %v102 = vld [vmem:[#allocation5 + $0xd8] sm:$0xff]
    %v103 = vld [vmem:[#allocation5 + $0xe0] sm:$0xff]
    %v104 = vld [vmem:[#allocation5 + $0xe8] sm:$0xff]
    %v105 = vld [vmem:[#allocation5 + $0xf0] sm:$0xff]
    %v106 = vld [vmem:[#allocation5 + $0xf8] sm:$0xff]
    %v107 = vld [vmem:[#allocation5 + $0x100] sm:$0xff]
    %v108 = vld [vmem:[#allocation5 + $0x108] sm:$0xff]
    %v109 = vld [vmem:[#allocation5 + $0x110] sm:$0xff]
    %v110 = vld [vmem:[#allocation5 + $0x118] sm:$0xff]
    %v111 = vld [vmem:[#allocation5 + $0x120] sm:$0xff]
    %v112 = vld [vmem:[#allocation5 + $0x128] sm:$0xff]
    %v113 = vld [vmem:[#allocation5 + $0x130] sm:$0xff]
    %v114 = vld [vmem:[#allocation5 + $0x138] sm:$0xff]
    %v115 = vld [vmem:[#allocation5 + $0x140] sm:$0xff]
    %v116 = vld [vmem:[#allocation5 + $0x148] sm:$0xff]
    %v117 = vld [vmem:[#allocation5 + $0x150] sm:$0xff]
    %v118 = vld [vmem:[#allocation5 + $0x158] sm:$0xff]
    %v119 = vld [vmem:[#allocation5 + $0x160] sm:$0xff]
    %v120 = vld [vmem:[#allocation5 + $0x168] sm:$0xff]
    %v121 = vld [vmem:[#allocation5 + $0x170] sm:$0xff]
    %v122 = vld [vmem:[#allocation5 + $0x178] sm:$0xff]
    %v123 = vld [vmem:[#allocation5 + $0x180] sm:$0xff]
    %v124 = vld [vmem:[#allocation5 + $0x188] sm:$0xff]
    %v125 = vld [vmem:[#allocation5 + $0x190] sm:$0xff]
    %v126 = vld [vmem:[#allocation5 + $0x198] sm:$0xff]
    %v127 = vld [vmem:[#allocation5 + $0x1a0] sm:$0xff]
    %v128 = vld [vmem:[#allocation5 + $0x1a8] sm:$0xff]
    %v129 = vld [vmem:[#allocation5 + $0x1b0] sm:$0xff]
    %v130 = vld [vmem:[#allocation5 + $0x1b8] sm:$0xff]
    %v131 = vld [vmem:[#allocation5 + $0x1c0] sm:$0xff]
    %v132 = vld [vmem:[#allocation5 + $0x1c8] sm:$0xff]
    %v133 = vld [vmem:[#allocation5 + $0x1d0] sm:$0xff]
    %v134 = vld [vmem:[#allocation5 + $0x1d8] sm:$0xff]
    %v135 = vld [vmem:[#allocation5 + $0x1e0] sm:$0xff]
    %v136 = vld [vmem:[#allocation5 + $0x1e8] sm:$0xff]
    %v137 = vld [vmem:[#allocation5 + $0x1f0] sm:$0xff]
    %v138 = vld [vmem:[#allocation5 + $0x1f8] sm:$0xff]
    %v139 = vld [vmem:[#allocation5 + $0x200] sm:$0xff]
    %v140 = vld [vmem:[#allocation5 + $0x208] sm:$0xff]
    %v141 = vld [vmem:[#allocation5 + $0x210] sm:$0xff]
    %v142 = vld [vmem:[#allocation5 + $0x218] sm:$0xff]
    %v143 = vld [vmem:[#allocation5 + $0x220] sm:$0xff]
    %v144 = vld [vmem:[#allocation5 + $0x228] sm:$0xff]
    %v145 = vld [vmem:[#allocation5 + $0x230] sm:$0xff]
    %v146 = vld [vmem:[#allocation5 + $0x238] sm:$0xff]
    %v147 = vld [vmem:[#allocation5 + $0x240] sm:$0xff]
    %v148 = vld [vmem:[#allocation5 + $0x248] sm:$0xff]
    %v149 = vld [vmem:[#allocation5 + $0x250] sm:$0xff]
    %v150 = vld [vmem:[#allocation5 + $0x258] sm:$0xff]
    %v151 = vld [vmem:[#allocation5 + $0x260] sm:$0xff]
    %v152 = vld [vmem:[#allocation5 + $0x268] sm:$0xff]
    %v153 = vld [vmem:[#allocation5 + $0x270] sm:$0xff]
    %v154 = vld [vmem:[#allocation5 + $0x278] sm:$0xff]
    %v155 = vld [vmem:[#allocation5 + $0x280] sm:$0xff]
    %v156 = vld [vmem:[#allocation5 + $0x288] sm:$0xff]
    %v157 = vld [vmem:[#allocation5 + $0x290] sm:$0xff]
    %v158 = vld [vmem:[#allocation5 + $0x298] sm:$0xff]
    %v159 = vld [vmem:[#allocation5 + $0x2a0] sm:$0xff]
    %v160 = vld [vmem:[#allocation5 + $0x2a8] sm:$0xff]
    %v161 = vld [vmem:[#allocation5 + $0x2b0] sm:$0xff]
    %v162 = vld [vmem:[#allocation5 + $0x2b8] sm:$0xff]
    %v163 = vld [vmem:[#allocation5 + $0x2c0] sm:$0xff]
    %v164 = vld [vmem:[#allocation5 + $0x2c8] sm:$0xff]
    %v165 = vld [vmem:[#allocation5 + $0x2d0] sm:$0xff]
    %v166 = vld [vmem:[#allocation5 + $0x2d8] sm:$0xff]
    %v167 = vld [vmem:[#allocation5 + $0x2e0] sm:$0xff]
    %v168 = vld [vmem:[#allocation5 + $0x2e8] sm:$0xff]
    %v169 = vld [vmem:[#allocation5 + $0x2f0] sm:$0xff]
    %v170 = vld [vmem:[#allocation5 + $0x2f8] sm:$0xff]
    %v171 = vld [vmem:[#allocation5 + $0x300] sm:$0xff]
    %v172 = vld [vmem:[#allocation5 + $0x308] sm:$0xff]
    %v173 = vld [vmem:[#allocation5 + $0x310] sm:$0xff]
    %v174 = vld [vmem:[#allocation5 + $0x318] sm:$0xff]
    %v175 = vld [vmem:[#allocation5 + $0x320] sm:$0xff]
    %v176 = vld [vmem:[#allocation5 + $0x328] sm:$0xff]
    %v177 = vld [vmem:[#allocation5 + $0x330] sm:$0xff]
    %v178 = vld [vmem:[#allocation5 + $0x338] sm:$0xff]
    %v179 = vld [vmem:[#allocation5 + $0x340] sm:$0xff]
    %v180 = vld [vmem:[#allocation5 + $0x348] sm:$0xff]
    %v181 = vld [vmem:[#allocation5 + $0x350] sm:$0xff]
    %v182 = vld [vmem:[#allocation5 + $0x358] sm:$0xff]
    %v183 = vld [vmem:[#allocation5 + $0x360] sm:$0xff]
    %v184 = vld [vmem:[#allocation5 + $0x368] sm:$0xff]
    %v185 = vld [vmem:[#allocation5 + $0x370] sm:$0xff]
    %v186 = vld [vmem:[#allocation5 + $0x378] sm:$0xff]
    %v187 = vld [vmem:[#allocation5 + $0x380] sm:$0xff]
    %v188 = vld [vmem:[#allocation5 + $0x388] sm:$0xff]
    %v189 = vld [vmem:[#allocation5 + $0x390] sm:$0xff]
    %v190 = vld [vmem:[#allocation5 + $0x398] sm:$0xff]
    %v191 = vld [vmem:[#allocation5 + $0x3a0] sm:$0xff]
    %v192 = vld [vmem:[#allocation5 + $0x3a8] sm:$0xff]
    %v193 = vld [vmem:[#allocation5 + $0x3b0] sm:$0xff]
    %v194 = vld [vmem:[#allocation5 + $0x3b8] sm:$0xff]
    %v195 = vld [vmem:[#allocation5 + $0x3c0] sm:$0xff]
    %v196 = vld [vmem:[#allocation5 + $0x3c8] sm:$0xff]
    %v197 = vld [vmem:[#allocation5 + $0x3d0] sm:$0xff]
    %v198 = vld [vmem:[#allocation5 + $0x3d8] sm:$0xff]
    %v199 = vld [vmem:[#allocation5 + $0x3e0] sm:$0xff]
    %v200 = vld [vmem:[#allocation5 + $0x3e8] sm:$0xff]
    %v201 = vld [vmem:[#allocation5 + $0x3f0] sm:$0xff]
    %v202 = vld [vmem:[#allocation5 + $0x3f8] sm:$0xff]
    %v203 = vld [vmem:[#allocation5 + $0x400] sm:$0xff]
    %v204 = vld [vmem:[#allocation5 + $0x408] sm:$0xff]
    %v205 = vld [vmem:[#allocation5 + $0x410] sm:$0xff]
    %v206 = vld [vmem:[#allocation5 + $0x418] sm:$0xff]
    %v207 = vld [vmem:[#allocation5 + $0x420] sm:$0xff]
    %v208 = vld [vmem:[#allocation5 + $0x428] sm:$0xff]
    %v209 = vld [vmem:[#allocation5 + $0x430] sm:$0xff]
    %v210 = vld [vmem:[#allocation5 + $0x438] sm:$0xff]
    %v211 = vld [vmem:[#allocation5 + $0x440] sm:$0xff]
    %v212 = vld [vmem:[#allocation5 + $0x448] sm:$0xff]
    %v213 = vld [vmem:[#allocation5 + $0x450] sm:$0xff]
    %v214 = vld [vmem:[#allocation5 + $0x458] sm:$0xff]
    %v215 = vld [vmem:[#allocation5 + $0x460] sm:$0xff]
    %v216 = vld [vmem:[#allocation5 + $0x468] sm:$0xff]
    %v217 = vld [vmem:[#allocation5 + $0x470] sm:$0xff]
    %v218 = vld [vmem:[#allocation5 + $0x478] sm:$0xff]
    %v219 = vld [vmem:[#allocation5 + $0x480] sm:$0xff]
    %v220 = vld [vmem:[#allocation5 + $0x488] sm:$0xff]
    %v221 = vld [vmem:[#allocation5 + $0x490] sm:$0xff]
    %v222 = vld [vmem:[#allocation5 + $0x498] sm:$0xff]
    %v223 = vld [vmem:[#allocation5 + $0x4a0] sm:$0xff]
    %v224 = vld [vmem:[#allocation5 + $0x4a8] sm:$0xff]
    %v225 = vld [vmem:[#allocation5 + $0x4b0] sm:$0xff]
    %v226 = vld [vmem:[#allocation5 + $0x4b8] sm:$0xff]
    %v227 = vld [vmem:[#allocation5 + $0x4c0] sm:$0xff]
    %v228 = vld [vmem:[#allocation5 + $0x4c8] sm:$0xff]
    %v229 = vld [vmem:[#allocation5 + $0x4d0] sm:$0xff]
    %v230 = vld [vmem:[#allocation5 + $0x4d8] sm:$0xff]
    %v231 = vld [vmem:[#allocation5 + $0x4e0] sm:$0xff]
    %v232 = vld [vmem:[#allocation5 + $0x4e8] sm:$0xff]
    %v233 = vld [vmem:[#allocation5 + $0x4f0] sm:$0xff]
    %v234 = vld [vmem:[#allocation5 + $0x4f8] sm:$0xff]
    %v235 = vld [vmem:[#allocation5 + $0x500] sm:$0xff]
    %v236 = vld [vmem:[#allocation5 + $0x508] sm:$0xff]
    %v237 = vld [vmem:[#allocation5 + $0x510] sm:$0xff]
    %v238 = vld [vmem:[#allocation5 + $0x518] sm:$0xff]
    %v239 = vld [vmem:[#allocation5 + $0x520] sm:$0xff]
    %v240 = vld [vmem:[#allocation5 + $0x528] sm:$0xff]
    %v241 = vld [vmem:[#allocation5 + $0x530] sm:$0xff]
    %v242 = vld [vmem:[#allocation5 + $0x538] sm:$0xff]
    %v243 = vld [vmem:[#allocation5 + $0x540] sm:$0xff]
    %v244 = vld [vmem:[#allocation5 + $0x548] sm:$0xff]
    %v245 = vld [vmem:[#allocation5 + $0x550] sm:$0xff]
    %v246 = vld [vmem:[#allocation5 + $0x558] sm:$0xff]
    %v247 = vld [vmem:[#allocation5 + $0x560] sm:$0xff]
    %v248 = vld [vmem:[#allocation5 + $0x568] sm:$0xff]
    %v249 = vld [vmem:[#allocation5 + $0x570] sm:$0xff]
    %v250 = vld [vmem:[#allocation5 + $0x578] sm:$0xff]
    %v251 = vld [vmem:[#allocation5 + $0x580] sm:$0xff]
    %v252 = vld [vmem:[#allocation5 + $0x588] sm:$0xff]
    %v253 = vld [vmem:[#allocation5 + $0x590] sm:$0xff]
    %v254 = vld [vmem:[#allocation5 + $0x598] sm:$0xff]
    %v255 = vld [vmem:[#allocation5 + $0x5a0] sm:$0xff]
    %v256 = vld [vmem:[#allocation5 + $0x5a8] sm:$0xff]
    %v257 = vld [vmem:[#allocation5 + $0x5b0] sm:$0xff]
    %v258 = vld [vmem:[#allocation5 + $0x5b8] sm:$0xff]
    %v259 = vld [vmem:[#allocation5 + $0x5c0] sm:$0xff]
    %v260 = vld [vmem:[#allocation5 + $0x5c8] sm:$0xff]
    %v261 = vld [vmem:[#allocation5 + $0x5d0] sm:$0xff]
    %v262 = vld [vmem:[#allocation5 + $0x5d8] sm:$0xff]
    %v263 = vld [vmem:[#allocation5 + $0x5e0] sm:$0xff]
    %v264 = vld [vmem:[#allocation5 + $0x5e8] sm:$0xff]
    %v265 = vld [vmem:[#allocation5 + $0x5f0] sm:$0xff]
    %v266 = vld [vmem:[#allocation5 + $0x5f8] sm:$0xff]
    %v267 = vld [vmem:[#allocation5 + $0x600] sm:$0xff]
    %v268 = vld [vmem:[#allocation5 + $0x608] sm:$0xff]
    %v269 = vld [vmem:[#allocation5 + $0x610] sm:$0xff]
    %v270 = vld [vmem:[#allocation5 + $0x618] sm:$0xff]
    %v271 = vld [vmem:[#allocation5 + $0x620] sm:$0xff]
    %v272 = vld [vmem:[#allocation5 + $0x628] sm:$0xff]
    %v273 = vld [vmem:[#allocation5 + $0x630] sm:$0xff]
    %v274 = vld [vmem:[#allocation5 + $0x638] sm:$0xff]
    %v275 = vld [vmem:[#allocation5 + $0x640] sm:$0xff]
    %v276 = vld [vmem:[#allocation5 + $0x648] sm:$0xff]
    %v277 = vld [vmem:[#allocation5 + $0x650] sm:$0xff]
    %v278 = vld [vmem:[#allocation5 + $0x658] sm:$0xff]
    %v279 = vld [vmem:[#allocation5 + $0x660] sm:$0xff]
    %v280 = vld [vmem:[#allocation5 + $0x668] sm:$0xff]
    %v281 = vld [vmem:[#allocation5 + $0x670] sm:$0xff]
    %v282 = vld [vmem:[#allocation5 + $0x678] sm:$0xff]
    %v283 = vld [vmem:[#allocation5 + $0x680] sm:$0xff]
    %v284 = vld [vmem:[#allocation5 + $0x688] sm:$0xff]
    %v285 = vld [vmem:[#allocation5 + $0x690] sm:$0xff]
    %v286 = vld [vmem:[#allocation5 + $0x698] sm:$0xff]
    %v287 = vld [vmem:[#allocation5 + $0x6a0] sm:$0xff]
    %v288 = vld [vmem:[#allocation5 + $0x6a8] sm:$0xff]
    %v289 = vld [vmem:[#allocation5 + $0x6b0] sm:$0xff]
    %v290 = vld [vmem:[#allocation5 + $0x6b8] sm:$0xff]
    %v291 = vld [vmem:[#allocation5 + $0x6c0] sm:$0xff]
    %v292 = vld [vmem:[#allocation5 + $0x6c8] sm:$0xff]
    %v293 = vld [vmem:[#allocation5 + $0x6d0] sm:$0xff]
    %v294 = vld [vmem:[#allocation5 + $0x6d8] sm:$0xff]
    %v295 = vld [vmem:[#allocation5 + $0x6e0] sm:$0xff]
    %v296 = vld [vmem:[#allocation5 + $0x6e8] sm:$0xff]
    %v297 = vld [vmem:[#allocation5 + $0x6f0] sm:$0xff]
    %v298 = vld [vmem:[#allocation5 + $0x6f8] sm:$0xff]
    %v299 = vld [vmem:[#allocation5 + $0x700] sm:$0xff]
    %v300 = vld [vmem:[#allocation5 + $0x708] sm:$0xff]
    %v301 = vld [vmem:[#allocation5 + $0x710] sm:$0xff]
    %v302 = vld [vmem:[#allocation5 + $0x718] sm:$0xff]
    %v303 = vld [vmem:[#allocation5 + $0x720] sm:$0xff]
    %v304 = vld [vmem:[#allocation5 + $0x728] sm:$0xff]
    %v305 = vld [vmem:[#allocation5 + $0x730] sm:$0xff]
    %v306 = vld [vmem:[#allocation5 + $0x738] sm:$0xff]
    %v307 = vld [vmem:[#allocation5 + $0x740] sm:$0xff]
    %v308 = vld [vmem:[#allocation5 + $0x748] sm:$0xff]
    %v309 = vld [vmem:[#allocation5 + $0x750] sm:$0xff]
    %v310 = vld [vmem:[#allocation5 + $0x758] sm:$0xff]
    %v311 = vld [vmem:[#allocation5 + $0x760] sm:$0xff]
    %v312 = vld [vmem:[#allocation5 + $0x768] sm:$0xff]
    %v313 = vld [vmem:[#allocation5 + $0x770] sm:$0xff]
    %v314 = vld [vmem:[#allocation5 + $0x778] sm:$0xff]
    %v315 = vld [vmem:[#allocation5 + $0x780] sm:$0xff]
    %v316 = vld [vmem:[#allocation5 + $0x788] sm:$0xff]
    %v317 = vld [vmem:[#allocation5 + $0x790] sm:$0xff]
    %v318 = vld [vmem:[#allocation5 + $0x798] sm:$0xff]
    %v319 = vld [vmem:[#allocation5 + $0x7a0] sm:$0xff]
    %v320 = vld [vmem:[#allocation5 + $0x7a8] sm:$0xff]
    %v321 = vld [vmem:[#allocation5 + $0x7b0] sm:$0xff]
    %v322 = vld [vmem:[#allocation5 + $0x7b8] sm:$0xff]
    %v323 = vld [vmem:[#allocation5 + $0x7c0] sm:$0xff]
    %v324 = vld [vmem:[#allocation5 + $0x7c8] sm:$0xff]
    %v325 = vld [vmem:[#allocation7] sm:$0xf]
    %v327 = vperm.slane %v325, 0
    %v328 = vperm.slane %v325, 1
    %v329 = vperm.slane %v325, 2
    %v330 = vperm.slane %v325, 3
    %v585 = vunpack.c.l.b16 %v75
    %v586 = vunpack.c.h.b16 %v75
    %v587 = vunpack.c.l.b16 %v76
    %v588 = vunpack.c.h.b16 %v76
    %v589 = vunpack.c.l.b16 %v77
    %v590 = vunpack.c.h.b16 %v77
    %v591 = vunpack.c.l.b16 %v78
    %v592 = vunpack.c.h.b16 %v78
    %v593 = vunpack.c.l.b16 %v79
    %v594 = vunpack.c.h.b16 %v79
    %v595 = vunpack.c.l.b16 %v80
    %v596 = vunpack.c.h.b16 %v80
    %v597 = vunpack.c.l.b16 %v81
    %v598 = vunpack.c.h.b16 %v81
    %v599 = vunpack.c.l.b16 %v82
    %v600 = vunpack.c.h.b16 %v82
    %v601 = vunpack.c.l.b16 %v83
    %v602 = vunpack.c.h.b16 %v83
    %v603 = vunpack.c.l.b16 %v84
    %v604 = vunpack.c.h.b16 %v84
    %v605 = vunpack.c.l.b16 %v85
    %v606 = vunpack.c.h.b16 %v85
    %v607 = vunpack.c.l.b16 %v86
    %v608 = vunpack.c.h.b16 %v86
    %v609 = vunpack.c.l.b16 %v87
    %v610 = vunpack.c.h.b16 %v87
    %v611 = vunpack.c.l.b16 %v88
    %v612 = vunpack.c.h.b16 %v88
    %v613 = vunpack.c.l.b16 %v89
    %v614 = vunpack.c.h.b16 %v89
    %v615 = vunpack.c.l.b16 %v90
    %v616 = vunpack.c.h.b16 %v90
    %v617 = vunpack.c.l.b16 %v91
    %v618 = vunpack.c.h.b16 %v91
    %v619 = vunpack.c.l.b16 %v92
    %v620 = vunpack.c.h.b16 %v92
    %v621 = vunpack.c.l.b16 %v93
    %v622 = vunpack.c.h.b16 %v93
    %v623 = vunpack.c.l.b16 %v94
    %v624 = vunpack.c.h.b16 %v94
    %v625 = vunpack.c.l.b16 %v95
    %v626 = vunpack.c.h.b16 %v95
    %v627 = vunpack.c.l.b16 %v96
    %v628 = vunpack.c.h.b16 %v96
    %v629 = vunpack.c.l.b16 %v97
    %v630 = vunpack.c.h.b16 %v97
    %v631 = vunpack.c.l.b16 %v98
    %v632 = vunpack.c.h.b16 %v98
    %v633 = vunpack.c.l.b16 %v99
    %v634 = vunpack.c.h.b16 %v99
    %v635 = vunpack.c.l.b16 %v100
    %v636 = vunpack.c.h.b16 %v100
    %v637 = vunpack.c.l.b16 %v101
    %v638 = vunpack.c.h.b16 %v101
    %v639 = vunpack.c.l.b16 %v102
    %v640 = vunpack.c.h.b16 %v102
    %v641 = vunpack.c.l.b16 %v103
    %v642 = vunpack.c.h.b16 %v103
    %v643 = vunpack.c.l.b16 %v104
    %v644 = vunpack.c.h.b16 %v104
    %v645 = vunpack.c.l.b16 %v105
    %v646 = vunpack.c.h.b16 %v105
    %v647 = vunpack.c.l.b16 %v106
    %v648 = vunpack.c.h.b16 %v106
    %v649 = vunpack.c.l.b16 %v107
    %v650 = vunpack.c.h.b16 %v107
    %v651 = vunpack.c.l.b16 %v108
    %v652 = vunpack.c.h.b16 %v108
    %v653 = vunpack.c.l.b16 %v109
    %v654 = vunpack.c.h.b16 %v109
    %v655 = vunpack.c.l.b16 %v110
    %v656 = vunpack.c.h.b16 %v110
    %v657 = vunpack.c.l.b16 %v111
    %v658 = vunpack.c.h.b16 %v111
    %v659 = vunpack.c.l.b16 %v112
    %v660 = vunpack.c.h.b16 %v112
    %v661 = vunpack.c.l.b16 %v113
    %v662 = vunpack.c.h.b16 %v113
    %v663 = vunpack.c.l.b16 %v114
    %v664 = vunpack.c.h.b16 %v114
    %v665 = vunpack.c.l.b16 %v115
    %v666 = vunpack.c.h.b16 %v115
    %v667 = vunpack.c.l.b16 %v116
    %v668 = vunpack.c.h.b16 %v116
    %v669 = vunpack.c.l.b16 %v117
    %v670 = vunpack.c.h.b16 %v117
    %v671 = vunpack.c.l.b16 %v118
    %v672 = vunpack.c.h.b16 %v118
    %v673 = vunpack.c.l.b16 %v119
    %v674 = vunpack.c.h.b16 %v119
    %v675 = vunpack.c.l.b16 %v120
    %v676 = vunpack.c.h.b16 %v120
    %v677 = vunpack.c.l.b16 %v121
    %v678 = vunpack.c.h.b16 %v121
    %v679 = vunpack.c.l.b16 %v122
    %v680 = vunpack.c.h.b16 %v122
    %v681 = vunpack.c.l.b16 %v123
    %v682 = vunpack.c.h.b16 %v123
    %v683 = vunpack.c.l.b16 %v124
    %v684 = vunpack.c.h.b16 %v124
    %v685 = vunpack.c.l.b16 %v125
    %v686 = vunpack.c.h.b16 %v125
    %v687 = vunpack.c.l.b16 %v126
    %v688 = vunpack.c.h.b16 %v126
    %v689 = vunpack.c.l.b16 %v127
    %v690 = vunpack.c.h.b16 %v127
    %v691 = vunpack.c.l.b16 %v128
    %v692 = vunpack.c.h.b16 %v128
    %v693 = vunpack.c.l.b16 %v129
    %v694 = vunpack.c.h.b16 %v129
    %v695 = vunpack.c.l.b16 %v130
    %v696 = vunpack.c.h.b16 %v130
    %v697 = vunpack.c.l.b16 %v131
    %v698 = vunpack.c.h.b16 %v131
    %v699 = vunpack.c.l.b16 %v132
    %v700 = vunpack.c.h.b16 %v132
    %v701 = vunpack.c.l.b16 %v133
    %v702 = vunpack.c.h.b16 %v133
    %v703 = vunpack.c.l.b16 %v134
    %v704 = vunpack.c.h.b16 %v134
    %v705 = vunpack.c.l.b16 %v135
    %v706 = vunpack.c.h.b16 %v135
    %v707 = vunpack.c.l.b16 %v136
    %v708 = vunpack.c.h.b16 %v136
    %v709 = vunpack.c.l.b16 %v137
    %v710 = vunpack.c.h.b16 %v137
    %v711 = vunpack.c.l.b16 %v138
    %v712 = vunpack.c.h.b16 %v138
    %v713 = vunpack.c.l.b16 %v139
    %v714 = vunpack.c.h.b16 %v139
    %v715 = vunpack.c.l.b16 %v140
    %v716 = vunpack.c.h.b16 %v140
    %v717 = vunpack.c.l.b16 %v141
    %v718 = vunpack.c.h.b16 %v141
    %v719 = vunpack.c.l.b16 %v142
    %v720 = vunpack.c.h.b16 %v142
    %v721 = vunpack.c.l.b16 %v143
    %v722 = vunpack.c.h.b16 %v143
    %v723 = vunpack.c.l.b16 %v144
    %v724 = vunpack.c.h.b16 %v144
    %v725 = vunpack.c.l.b16 %v145
    %v726 = vunpack.c.h.b16 %v145
    %v727 = vunpack.c.l.b16 %v146
    %v728 = vunpack.c.h.b16 %v146
    %v729 = vunpack.c.l.b16 %v147
    %v730 = vunpack.c.h.b16 %v147
    %v731 = vunpack.c.l.b16 %v148
    %v732 = vunpack.c.h.b16 %v148
    %v733 = vunpack.c.l.b16 %v149
    %v734 = vunpack.c.h.b16 %v149
    %v735 = vunpack.c.l.b16 %v150
    %v736 = vunpack.c.h.b16 %v150
    %v737 = vunpack.c.l.b16 %v151
    %v738 = vunpack.c.h.b16 %v151
    %v739 = vunpack.c.l.b16 %v152
    %v740 = vunpack.c.h.b16 %v152
    %v741 = vunpack.c.l.b16 %v153
    %v742 = vunpack.c.h.b16 %v153
    %v743 = vunpack.c.l.b16 %v154
    %v744 = vunpack.c.h.b16 %v154
    %v745 = vunpack.c.l.b16 %v155
    %v746 = vunpack.c.h.b16 %v155
    %v747 = vunpack.c.l.b16 %v156
    %v748 = vunpack.c.h.b16 %v156
    %v749 = vunpack.c.l.b16 %v157
    %v750 = vunpack.c.h.b16 %v157
    %v751 = vunpack.c.l.b16 %v158
    %v752 = vunpack.c.h.b16 %v158
    %v753 = vunpack.c.l.b16 %v159
    %v754 = vunpack.c.h.b16 %v159
    %v755 = vunpack.c.l.b16 %v160
    %v756 = vunpack.c.h.b16 %v160
    %v757 = vunpack.c.l.b16 %v161
    %v758 = vunpack.c.h.b16 %v161
    %v759 = vunpack.c.l.b16 %v162
    %v760 = vunpack.c.h.b16 %v162
    %v761 = vunpack.c.l.b16 %v163
    %v762 = vunpack.c.h.b16 %v163
    %v763 = vunpack.c.l.b16 %v164
    %v764 = vunpack.c.h.b16 %v164
    %v765 = vunpack.c.l.b16 %v165
    %v766 = vunpack.c.h.b16 %v165
    %v767 = vunpack.c.l.b16 %v166
    %v768 = vunpack.c.h.b16 %v166
    %v769 = vunpack.c.l.b16 %v167
    %v770 = vunpack.c.h.b16 %v167
    %v771 = vunpack.c.l.b16 %v168
    %v772 = vunpack.c.h.b16 %v168
    %v773 = vunpack.c.l.b16 %v169
    %v774 = vunpack.c.h.b16 %v169
    %v775 = vunpack.c.l.b16 %v170
    %v776 = vunpack.c.h.b16 %v170
    %v777 = vunpack.c.l.b16 %v171
    %v778 = vunpack.c.h.b16 %v171
    %v779 = vunpack.c.l.b16 %v172
    %v780 = vunpack.c.h.b16 %v172
    %v781 = vunpack.c.l.b16 %v173
    %v782 = vunpack.c.h.b16 %v173
    %v783 = vunpack.c.l.b16 %v174
    %v784 = vunpack.c.h.b16 %v174
    %v785 = vunpack.c.l.b16 %v175
    %v786 = vunpack.c.h.b16 %v175
    %v787 = vunpack.c.l.b16 %v176
    %v788 = vunpack.c.h.b16 %v176
    %v789 = vunpack.c.l.b16 %v177
    %v790 = vunpack.c.h.b16 %v177
    %v791 = vunpack.c.l.b16 %v178
    %v792 = vunpack.c.h.b16 %v178
    %v793 = vunpack.c.l.b16 %v179
    %v794 = vunpack.c.h.b16 %v179
    %v795 = vunpack.c.l.b16 %v180
    %v796 = vunpack.c.h.b16 %v180
    %v797 = vunpack.c.l.b16 %v181
    %v798 = vunpack.c.h.b16 %v181
    %v799 = vunpack.c.l.b16 %v182
    %v800 = vunpack.c.h.b16 %v182
    %v801 = vunpack.c.l.b16 %v183
    %v802 = vunpack.c.h.b16 %v183
    %v803 = vunpack.c.l.b16 %v184
    %v804 = vunpack.c.h.b16 %v184
    %v805 = vunpack.c.l.b16 %v185
    %v806 = vunpack.c.h.b16 %v185
    %v807 = vunpack.c.l.b16 %v186
    %v808 = vunpack.c.h.b16 %v186
    %v809 = vunpack.c.l.b16 %v187
    %v810 = vunpack.c.h.b16 %v187
    %v811 = vunpack.c.l.b16 %v188
    %v812 = vunpack.c.h.b16 %v188
    %v813 = vunpack.c.l.b16 %v189
    %v814 = vunpack.c.h.b16 %v189
    %v815 = vunpack.c.l.b16 %v190
    %v816 = vunpack.c.h.b16 %v190
    %v817 = vunpack.c.l.b16 %v191
    %v818 = vunpack.c.h.b16 %v191
    %v819 = vunpack.c.l.b16 %v192
    %v820 = vunpack.c.h.b16 %v192
    %v821 = vunpack.c.l.b16 %v193
    %v822 = vunpack.c.h.b16 %v193
    %v823 = vunpack.c.l.b16 %v194
    %v824 = vunpack.c.h.b16 %v194
    %v825 = vunpack.c.l.b16 %v195
    %v826 = vunpack.c.h.b16 %v195
    %v827 = vunpack.c.l.b16 %v196
    %v828 = vunpack.c.h.b16 %v196
    %v829 = vunpack.c.l.b16 %v197
    %v830 = vunpack.c.h.b16 %v197
    %v831 = vunpack.c.l.b16 %v198
    %v832 = vunpack.c.h.b16 %v198
    %v833 = vunpack.c.l.b16 %v199
    %v834 = vunpack.c.h.b16 %v199
    %v835 = vunpack.c.l.b16 %v200
    %v836 = vunpack.c.h.b16 %v200
    %v837 = vunpack.c.l.b16 %v201
    %v838 = vunpack.c.h.b16 %v201
    %v839 = vunpack.c.l.b16 %v202
    %v840 = vunpack.c.h.b16 %v202
    %v841 = vunpack.c.l.b16 %v203
    %v842 = vunpack.c.h.b16 %v203
    %v843 = vunpack.c.l.b16 %v204
    %v844 = vunpack.c.h.b16 %v204
    %v845 = vunpack.c.l.b16 %v205
    %v846 = vunpack.c.h.b16 %v205
    %v847 = vunpack.c.l.b16 %v206
    %v848 = vunpack.c.h.b16 %v206
    %v849 = vunpack.c.l.b16 %v207
    %v850 = vunpack.c.h.b16 %v207
    %v851 = vunpack.c.l.b16 %v208
    %v852 = vunpack.c.h.b16 %v208
    %v853 = vunpack.c.l.b16 %v209
    %v854 = vunpack.c.h.b16 %v209
    %v855 = vunpack.c.l.b16 %v210
    %v856 = vunpack.c.h.b16 %v210
    %v857 = vunpack.c.l.b16 %v211
    %v858 = vunpack.c.h.b16 %v211
    %v859 = vunpack.c.l.b16 %v212
    %v860 = vunpack.c.h.b16 %v212
    %v861 = vunpack.c.l.b16 %v213
    %v862 = vunpack.c.h.b16 %v213
    %v863 = vunpack.c.l.b16 %v214
    %v864 = vunpack.c.h.b16 %v214
    %v865 = vunpack.c.l.b16 %v215
    %v866 = vunpack.c.h.b16 %v215
    %v867 = vunpack.c.l.b16 %v216
    %v868 = vunpack.c.h.b16 %v216
    %v869 = vunpack.c.l.b16 %v217
    %v870 = vunpack.c.h.b16 %v217
    %v871 = vunpack.c.l.b16 %v218
    %v872 = vunpack.c.h.b16 %v218
    %v873 = vunpack.c.l.b16 %v219
    %v874 = vunpack.c.h.b16 %v219
    %v875 = vunpack.c.l.b16 %v220
    %v876 = vunpack.c.h.b16 %v220
    %v877 = vunpack.c.l.b16 %v221
    %v878 = vunpack.c.h.b16 %v221
    %v879 = vunpack.c.l.b16 %v222
    %v880 = vunpack.c.h.b16 %v222
    %v881 = vunpack.c.l.b16 %v223
    %v882 = vunpack.c.h.b16 %v223
    %v883 = vunpack.c.l.b16 %v224
    %v884 = vunpack.c.h.b16 %v224
    %v885 = vunpack.c.l.b16 %v225
    %v886 = vunpack.c.h.b16 %v225
    %v887 = vunpack.c.l.b16 %v226
    %v888 = vunpack.c.h.b16 %v226
    %v889 = vunpack.c.l.b16 %v227
    %v890 = vunpack.c.h.b16 %v227
    %v891 = vunpack.c.l.b16 %v228
    %v892 = vunpack.c.h.b16 %v228
    %v893 = vunpack.c.l.b16 %v229
    %v894 = vunpack.c.h.b16 %v229
    %v895 = vunpack.c.l.b16 %v230
    %v896 = vunpack.c.h.b16 %v230
    %v897 = vunpack.c.l.b16 %v231
    %v898 = vunpack.c.h.b16 %v231
    %v899 = vunpack.c.l.b16 %v232
    %v900 = vunpack.c.h.b16 %v232
    %v901 = vunpack.c.l.b16 %v233
    %v902 = vunpack.c.h.b16 %v233
    %v903 = vunpack.c.l.b16 %v234
    %v904 = vunpack.c.h.b16 %v234
    %v905 = vunpack.c.l.b16 %v235
    %v906 = vunpack.c.h.b16 %v235
    %v907 = vunpack.c.l.b16 %v236
    %v908 = vunpack.c.h.b16 %v236
    %v909 = vunpack.c.l.b16 %v237
    %v910 = vunpack.c.h.b16 %v237
    %v911 = vunpack.c.l.b16 %v238
    %v912 = vunpack.c.h.b16 %v238
    %v913 = vunpack.c.l.b16 %v239
    %v914 = vunpack.c.h.b16 %v239
    %v915 = vunpack.c.l.b16 %v240
    %v916 = vunpack.c.h.b16 %v240
    %v917 = vunpack.c.l.b16 %v241
    %v918 = vunpack.c.h.b16 %v241
    %v919 = vunpack.c.l.b16 %v242
    %v920 = vunpack.c.h.b16 %v242
    %v921 = vunpack.c.l.b16 %v243
    %v922 = vunpack.c.h.b16 %v243
    %v923 = vunpack.c.l.b16 %v244
    %v924 = vunpack.c.h.b16 %v244
    %v925 = vunpack.c.l.b16 %v245
    %v926 = vunpack.c.h.b16 %v245
    %v927 = vunpack.c.l.b16 %v246
    %v928 = vunpack.c.h.b16 %v246
    %v929 = vunpack.c.l.b16 %v247
    %v930 = vunpack.c.h.b16 %v247
    %v931 = vunpack.c.l.b16 %v248
    %v932 = vunpack.c.h.b16 %v248
    %v933 = vunpack.c.l.b16 %v249
    %v934 = vunpack.c.h.b16 %v249
    %v935 = vunpack.c.l.b16 %v250
    %v936 = vunpack.c.h.b16 %v250
    %v937 = vunpack.c.l.b16 %v251
    %v938 = vunpack.c.h.b16 %v251
    %v939 = vunpack.c.l.b16 %v252
    %v940 = vunpack.c.h.b16 %v252
    %v941 = vunpack.c.l.b16 %v253
    %v942 = vunpack.c.h.b16 %v253
    %v943 = vunpack.c.l.b16 %v254
    %v944 = vunpack.c.h.b16 %v254
    %v945 = vunpack.c.l.b16 %v255
    %v946 = vunpack.c.h.b16 %v255
    %v947 = vunpack.c.l.b16 %v256
    %v948 = vunpack.c.h.b16 %v256
    %v949 = vunpack.c.l.b16 %v257
    %v950 = vunpack.c.h.b16 %v257
    %v951 = vunpack.c.l.b16 %v258
    %v952 = vunpack.c.h.b16 %v258
    %v953 = vunpack.c.l.b16 %v259
    %v954 = vunpack.c.h.b16 %v259
    %v955 = vunpack.c.l.b16 %v260
    %v956 = vunpack.c.h.b16 %v260
    %v957 = vunpack.c.l.b16 %v261
    %v958 = vunpack.c.h.b16 %v261
    %v959 = vunpack.c.l.b16 %v262
    %v960 = vunpack.c.h.b16 %v262
    %v961 = vunpack.c.l.b16 %v263
    %v962 = vunpack.c.h.b16 %v263
    %v963 = vunpack.c.l.b16 %v264
    %v964 = vunpack.c.h.b16 %v264
    %v965 = vunpack.c.l.b16 %v265
    %v966 = vunpack.c.h.b16 %v265
    %v967 = vunpack.c.l.b16 %v266
    %v968 = vunpack.c.h.b16 %v266
    %v969 = vunpack.c.l.b16 %v267
    %v970 = vunpack.c.h.b16 %v267
    %v971 = vunpack.c.l.b16 %v268
    %v972 = vunpack.c.h.b16 %v268
    %v973 = vunpack.c.l.b16 %v269
    %v974 = vunpack.c.h.b16 %v269
    %v975 = vunpack.c.l.b16 %v270
    %v976 = vunpack.c.h.b16 %v270
    %v977 = vunpack.c.l.b16 %v271
    %v978 = vunpack.c.h.b16 %v271
    %v979 = vunpack.c.l.b16 %v272
    %v980 = vunpack.c.h.b16 %v272
    %v981 = vunpack.c.l.b16 %v273
    %v982 = vunpack.c.h.b16 %v273
    %v983 = vunpack.c.l.b16 %v274
    %v984 = vunpack.c.h.b16 %v274
    %v985 = vunpack.c.l.b16 %v275
    %v986 = vunpack.c.h.b16 %v275
    %v987 = vunpack.c.l.b16 %v276
    %v988 = vunpack.c.h.b16 %v276
    %v989 = vunpack.c.l.b16 %v277
    %v990 = vunpack.c.h.b16 %v277
    %v991 = vunpack.c.l.b16 %v278
    %v992 = vunpack.c.h.b16 %v278
    %v993 = vunpack.c.l.b16 %v279
    %v994 = vunpack.c.h.b16 %v279
    %v995 = vunpack.c.l.b16 %v280
    %v996 = vunpack.c.h.b16 %v280
    %v997 = vunpack.c.l.b16 %v281
    %v998 = vunpack.c.h.b16 %v281
    %v999 = vunpack.c.l.b16 %v282
    %v1000 = vunpack.c.h.b16 %v282
    %v1001 = vunpack.c.l.b16 %v283
    %v1002 = vunpack.c.h.b16 %v283
    %v1003 = vunpack.c.l.b16 %v284
    %v1004 = vunpack.c.h.b16 %v284
    %v1005 = vunpack.c.l.b16 %v285
    %v1006 = vunpack.c.h.b16 %v285
    %v1007 = vunpack.c.l.b16 %v286
    %v1008 = vunpack.c.h.b16 %v286
    %v1009 = vunpack.c.l.b16 %v287
    %v1010 = vunpack.c.h.b16 %v287
    %v1011 = vunpack.c.l.b16 %v288
    %v1012 = vunpack.c.h.b16 %v288
    %v1013 = vunpack.c.l.b16 %v289
    %v1014 = vunpack.c.h.b16 %v289
    %v1015 = vunpack.c.l.b16 %v290
    %v1016 = vunpack.c.h.b16 %v290
    %v1017 = vunpack.c.l.b16 %v291
    %v1018 = vunpack.c.h.b16 %v291
    %v1019 = vunpack.c.l.b16 %v292
    %v1020 = vunpack.c.h.b16 %v292
    %v1021 = vunpack.c.l.b16 %v293
    %v1022 = vunpack.c.h.b16 %v293
    %v1023 = vunpack.c.l.b16 %v294
    %v1024 = vunpack.c.h.b16 %v294
    %v1025 = vunpack.c.l.b16 %v295
    %v1026 = vunpack.c.h.b16 %v295
    %v1027 = vunpack.c.l.b16 %v296
    %v1028 = vunpack.c.h.b16 %v296
    %v1029 = vunpack.c.l.b16 %v297
    %v1030 = vunpack.c.h.b16 %v297
    %v1031 = vunpack.c.l.b16 %v298
    %v1032 = vunpack.c.h.b16 %v298
    %v1033 = vunpack.c.l.b16 %v299
    %v1034 = vunpack.c.h.b16 %v299
    %v1035 = vunpack.c.l.b16 %v300
    %v1036 = vunpack.c.h.b16 %v300
    %v1037 = vunpack.c.l.b16 %v301
    %v1038 = vunpack.c.h.b16 %v301
    %v1039 = vunpack.c.l.b16 %v302
    %v1040 = vunpack.c.h.b16 %v302
    %v1041 = vunpack.c.l.b16 %v303
    %v1042 = vunpack.c.h.b16 %v303
    %v1043 = vunpack.c.l.b16 %v304
    %v1044 = vunpack.c.h.b16 %v304
    %v1045 = vunpack.c.l.b16 %v305
    %v1046 = vunpack.c.h.b16 %v305
    %v1047 = vunpack.c.l.b16 %v306
    %v1048 = vunpack.c.h.b16 %v306
    %v1049 = vunpack.c.l.b16 %v307
    %v1050 = vunpack.c.h.b16 %v307
    %v1051 = vunpack.c.l.b16 %v308
    %v1052 = vunpack.c.h.b16 %v308
    %v1053 = vunpack.c.l.b16 %v309
    %v1054 = vunpack.c.h.b16 %v309
    %v1055 = vunpack.c.l.b16 %v310
    %v1056 = vunpack.c.h.b16 %v310
    %v1057 = vunpack.c.l.b16 %v311
    %v1058 = vunpack.c.h.b16 %v311
    %v1059 = vunpack.c.l.b16 %v312
    %v1060 = vunpack.c.h.b16 %v312
    %v1061 = vunpack.c.l.b16 %v313
    %v1062 = vunpack.c.h.b16 %v313
    %v1063 = vunpack.c.l.b16 %v314
    %v1064 = vunpack.c.h.b16 %v314
    %v1065 = vunpack.c.l.b16 %v315
    %v1066 = vunpack.c.h.b16 %v315
    %v1067 = vunpack.c.l.b16 %v316
    %v1068 = vunpack.c.h.b16 %v316
    %v1069 = vunpack.c.l.b16 %v317
    %v1070 = vunpack.c.h.b16 %v317
    %v1071 = vunpack.c.l.b16 %v318
    %v1072 = vunpack.c.h.b16 %v318
    %v1073 = vunpack.c.l.b16 %v319
    %v1074 = vunpack.c.h.b16 %v319
    %v1075 = vunpack.c.l.b16 %v320
    %v1076 = vunpack.c.h.b16 %v320
    %v1077 = vunpack.c.l.b16 %v321
    %v1078 = vunpack.c.h.b16 %v321
    %v1079 = vunpack.c.l.b16 %v322
    %v1080 = vunpack.c.h.b16 %v322
    %v1081 = vunpack.c.l.b16 %v323
    %v1082 = vunpack.c.h.b16 %v323
    %v1083 = vunpack.c.l.b16 %v324
    %v1084 = vunpack.c.h.b16 %v324
    %v1085 = vpack.c.b16 %v589, %v585
    %v1086 = vpack.c.b16 %v590, %v586
    %v1087 = vpack.c.b16 %v591, %v587
    %v1088 = vpack.c.b16 %v592, %v588
    %v1089 = vpack.c.b16 %v597, %v593
    %v1090 = vpack.c.b16 %v598, %v594
    %v1091 = vpack.c.b16 %v599, %v595
    %v1092 = vpack.c.b16 %v600, %v596
    %v1093 = vpack.c.b16 %v605, %v601
    %v1094 = vpack.c.b16 %v606, %v602
    %v1095 = vpack.c.b16 %v607, %v603
    %v1096 = vpack.c.b16 %v608, %v604
    %v1097 = vpack.c.b16 %v613, %v609
    %v1098 = vpack.c.b16 %v614, %v610
    %v1099 = vpack.c.b16 %v615, %v611
    %v1100 = vpack.c.b16 %v616, %v612
    %v1101 = vpack.c.b16 %v621, %v617
    %v1102 = vpack.c.b16 %v622, %v618
    %v1103 = vpack.c.b16 %v623, %v619
    %v1104 = vpack.c.b16 %v624, %v620
    %v1105 = vpack.c.b16 %v629, %v625
    %v1106 = vpack.c.b16 %v630, %v626
    %v1107 = vpack.c.b16 %v631, %v627
    %v1108 = vpack.c.b16 %v632, %v628
    %v1109 = vpack.c.b16 %v637, %v633
    %v1110 = vpack.c.b16 %v638, %v634
    %v1111 = vpack.c.b16 %v639, %v635
    %v1112 = vpack.c.b16 %v640, %v636
    %v1113 = vpack.c.b16 %v645, %v641
    %v1114 = vpack.c.b16 %v646, %v642
    %v1115 = vpack.c.b16 %v647, %v643
    %v1116 = vpack.c.b16 %v648, %v644
    %v1117 = vpack.c.b16 %v653, %v649
    %v1118 = vpack.c.b16 %v654, %v650
    %v1119 = vpack.c.b16 %v655, %v651
    %v1120 = vpack.c.b16 %v656, %v652
    %v1121 = vpack.c.b16 %v661, %v657
    %v1122 = vpack.c.b16 %v662, %v658
    %v1123 = vpack.c.b16 %v663, %v659
    %v1124 = vpack.c.b16 %v664, %v660
    %v1125 = vpack.c.b16 %v669, %v665
    %v1126 = vpack.c.b16 %v670, %v666
    %v1127 = vpack.c.b16 %v671, %v667
    %v1128 = vpack.c.b16 %v672, %v668
    %v1129 = vpack.c.b16 %v677, %v673
    %v1130 = vpack.c.b16 %v678, %v674
    %v1131 = vpack.c.b16 %v679, %v675
    %v1132 = vpack.c.b16 %v680, %v676
    %v1133 = vpack.c.b16 %v685, %v681
    %v1134 = vpack.c.b16 %v686, %v682
    %v1135 = vpack.c.b16 %v687, %v683
    %v1136 = vpack.c.b16 %v688, %v684
    %v1137 = vpack.c.b16 %v693, %v689
    %v1138 = vpack.c.b16 %v694, %v690
    %v1139 = vpack.c.b16 %v695, %v691
    %v1140 = vpack.c.b16 %v696, %v692
    %v1141 = vpack.c.b16 %v701, %v697
    %v1142 = vpack.c.b16 %v702, %v698
    %v1143 = vpack.c.b16 %v703, %v699
    %v1144 = vpack.c.b16 %v704, %v700
    %v1145 = vpack.c.b16 %v709, %v705
    %v1146 = vpack.c.b16 %v710, %v706
    %v1147 = vpack.c.b16 %v711, %v707
    %v1148 = vpack.c.b16 %v712, %v708
    %v1149 = vpack.c.b16 %v717, %v713
    %v1150 = vpack.c.b16 %v718, %v714
    %v1151 = vpack.c.b16 %v719, %v715
    %v1152 = vpack.c.b16 %v720, %v716
    %v1153 = vpack.c.b16 %v725, %v721
    %v1154 = vpack.c.b16 %v726, %v722
    %v1155 = vpack.c.b16 %v727, %v723
    %v1156 = vpack.c.b16 %v728, %v724
    %v1157 = vpack.c.b16 %v733, %v729
    %v1158 = vpack.c.b16 %v734, %v730
    %v1159 = vpack.c.b16 %v735, %v731
    %v1160 = vpack.c.b16 %v736, %v732
    %v1161 = vpack.c.b16 %v741, %v737
    %v1162 = vpack.c.b16 %v742, %v738
    %v1163 = vpack.c.b16 %v743, %v739
    %v1164 = vpack.c.b16 %v744, %v740
    %v1165 = vpack.c.b16 %v749, %v745
    %v1166 = vpack.c.b16 %v750, %v746
    %v1167 = vpack.c.b16 %v751, %v747
    %v1168 = vpack.c.b16 %v752, %v748
    %v1169 = vpack.c.b16 %v757, %v753
    %v1170 = vpack.c.b16 %v758, %v754
    %v1171 = vpack.c.b16 %v759, %v755
    %v1172 = vpack.c.b16 %v760, %v756
    %v1173 = vpack.c.b16 %v765, %v761
    %v1174 = vpack.c.b16 %v766, %v762
    %v1175 = vpack.c.b16 %v767, %v763
    %v1176 = vpack.c.b16 %v768, %v764
    %v1177 = vpack.c.b16 %v773, %v769
    %v1178 = vpack.c.b16 %v774, %v770
    %v1179 = vpack.c.b16 %v775, %v771
    %v1180 = vpack.c.b16 %v776, %v772
    %v1181 = vpack.c.b16 %v781, %v777
    %v1182 = vpack.c.b16 %v782, %v778
    %v1183 = vpack.c.b16 %v783, %v779
    %v1184 = vpack.c.b16 %v784, %v780
    %v1185 = vpack.c.b16 %v789, %v785
    %v1186 = vpack.c.b16 %v790, %v786
    %v1187 = vpack.c.b16 %v791, %v787
    %v1188 = vpack.c.b16 %v792, %v788
    %v1189 = vpack.c.b16 %v797, %v793
    %v1190 = vpack.c.b16 %v798, %v794
    %v1191 = vpack.c.b16 %v799, %v795
    %v1192 = vpack.c.b16 %v800, %v796
    %v1193 = vpack.c.b16 %v805, %v801
    %v1194 = vpack.c.b16 %v806, %v802
    %v1195 = vpack.c.b16 %v807, %v803
    %v1196 = vpack.c.b16 %v808, %v804
    %v1197 = vpack.c.b16 %v813, %v809
    %v1198 = vpack.c.b16 %v814, %v810
    %v1199 = vpack.c.b16 %v815, %v811
    %v1200 = vpack.c.b16 %v816, %v812
    %v1201 = vpack.c.b16 %v821, %v817
    %v1202 = vpack.c.b16 %v822, %v818
    %v1203 = vpack.c.b16 %v823, %v819
    %v1204 = vpack.c.b16 %v824, %v820
    %v1205 = vpack.c.b16 %v829, %v825
    %v1206 = vpack.c.b16 %v830, %v826
    %v1207 = vpack.c.b16 %v831, %v827
    %v1208 = vpack.c.b16 %v832, %v828
    %v1209 = vpack.c.b16 %v837, %v833
    %v1210 = vpack.c.b16 %v838, %v834
    %v1211 = vpack.c.b16 %v839, %v835
    %v1212 = vpack.c.b16 %v840, %v836
    %v1213 = vpack.c.b16 %v845, %v841
    %v1214 = vpack.c.b16 %v846, %v842
    %v1215 = vpack.c.b16 %v847, %v843
    %v1216 = vpack.c.b16 %v848, %v844
    %v1217 = vpack.c.b16 %v853, %v849
    %v1218 = vpack.c.b16 %v854, %v850
    %v1219 = vpack.c.b16 %v855, %v851
    %v1220 = vpack.c.b16 %v856, %v852
    %v1221 = vpack.c.b16 %v861, %v857
    %v1222 = vpack.c.b16 %v862, %v858
    %v1223 = vpack.c.b16 %v863, %v859
    %v1224 = vpack.c.b16 %v864, %v860
    %v1225 = vpack.c.b16 %v869, %v865
    %v1226 = vpack.c.b16 %v870, %v866
    %v1227 = vpack.c.b16 %v871, %v867
    %v1228 = vpack.c.b16 %v872, %v868
    %v1229 = vpack.c.b16 %v877, %v873
    %v1230 = vpack.c.b16 %v878, %v874
    %v1231 = vpack.c.b16 %v879, %v875
    %v1232 = vpack.c.b16 %v880, %v876
    %v1233 = vpack.c.b16 %v885, %v881
    %v1234 = vpack.c.b16 %v886, %v882
    %v1235 = vpack.c.b16 %v887, %v883
    %v1236 = vpack.c.b16 %v888, %v884
    %v1237 = vpack.c.b16 %v893, %v889
    %v1238 = vpack.c.b16 %v894, %v890
    %v1239 = vpack.c.b16 %v895, %v891
    %v1240 = vpack.c.b16 %v896, %v892
    %v1241 = vpack.c.b16 %v901, %v897
    %v1242 = vpack.c.b16 %v902, %v898
    %v1243 = vpack.c.b16 %v903, %v899
    %v1244 = vpack.c.b16 %v904, %v900
    %v1245 = vpack.c.b16 %v909, %v905
    %v1246 = vpack.c.b16 %v910, %v906
    %v1247 = vpack.c.b16 %v911, %v907
    %v1248 = vpack.c.b16 %v912, %v908
    %v1249 = vpack.c.b16 %v917, %v913
    %v1250 = vpack.c.b16 %v918, %v914
    %v1251 = vpack.c.b16 %v919, %v915
    %v1252 = vpack.c.b16 %v920, %v916
    %v1253 = vpack.c.b16 %v925, %v921
    %v1254 = vpack.c.b16 %v926, %v922
    %v1255 = vpack.c.b16 %v927, %v923
    %v1256 = vpack.c.b16 %v928, %v924
    %v1257 = vpack.c.b16 %v933, %v929
    %v1258 = vpack.c.b16 %v934, %v930
    %v1259 = vpack.c.b16 %v935, %v931
    %v1260 = vpack.c.b16 %v936, %v932
    %v1261 = vpack.c.b16 %v941, %v937
    %v1262 = vpack.c.b16 %v942, %v938
    %v1263 = vpack.c.b16 %v943, %v939
    %v1264 = vpack.c.b16 %v944, %v940
    %v1265 = vpack.c.b16 %v949, %v945
    %v1266 = vpack.c.b16 %v950, %v946
    %v1267 = vpack.c.b16 %v951, %v947
    %v1268 = vpack.c.b16 %v952, %v948
    %v1269 = vpack.c.b16 %v957, %v953
    %v1270 = vpack.c.b16 %v958, %v954
    %v1271 = vpack.c.b16 %v959, %v955
    %v1272 = vpack.c.b16 %v960, %v956
    %v1273 = vpack.c.b16 %v965, %v961
    %v1274 = vpack.c.b16 %v966, %v962
    %v1275 = vpack.c.b16 %v967, %v963
    %v1276 = vpack.c.b16 %v968, %v964
    %v1277 = vpack.c.b16 %v973, %v969
    %v1278 = vpack.c.b16 %v974, %v970
    %v1279 = vpack.c.b16 %v975, %v971
    %v1280 = vpack.c.b16 %v976, %v972
    %v1281 = vpack.c.b16 %v981, %v977
    %v1282 = vpack.c.b16 %v982, %v978
    %v1283 = vpack.c.b16 %v983, %v979
    %v1284 = vpack.c.b16 %v984, %v980
    %v1285 = vpack.c.b16 %v989, %v985
    %v1286 = vpack.c.b16 %v990, %v986
    %v1287 = vpack.c.b16 %v991, %v987
    %v1288 = vpack.c.b16 %v992, %v988
    %v1289 = vpack.c.b16 %v997, %v993
    %v1290 = vpack.c.b16 %v998, %v994
    %v1291 = vpack.c.b16 %v999, %v995
    %v1292 = vpack.c.b16 %v1000, %v996
    %v1293 = vpack.c.b16 %v1005, %v1001
    %v1294 = vpack.c.b16 %v1006, %v1002
    %v1295 = vpack.c.b16 %v1007, %v1003
    %v1296 = vpack.c.b16 %v1008, %v1004
    %v1297 = vpack.c.b16 %v1013, %v1009
    %v1298 = vpack.c.b16 %v1014, %v1010
    %v1299 = vpack.c.b16 %v1015, %v1011
    %v1300 = vpack.c.b16 %v1016, %v1012
    %v1301 = vpack.c.b16 %v1021, %v1017
    %v1302 = vpack.c.b16 %v1022, %v1018
    %v1303 = vpack.c.b16 %v1023, %v1019
    %v1304 = vpack.c.b16 %v1024, %v1020
    %v1305 = vpack.c.b16 %v1029, %v1025
    %v1306 = vpack.c.b16 %v1030, %v1026
    %v1307 = vpack.c.b16 %v1031, %v1027
    %v1308 = vpack.c.b16 %v1032, %v1028
    %v1309 = vpack.c.b16 %v1037, %v1033
    %v1310 = vpack.c.b16 %v1038, %v1034
    %v1311 = vpack.c.b16 %v1039, %v1035
    %v1312 = vpack.c.b16 %v1040, %v1036
    %v1313 = vpack.c.b16 %v1045, %v1041
    %v1314 = vpack.c.b16 %v1046, %v1042
    %v1315 = vpack.c.b16 %v1047, %v1043
    %v1316 = vpack.c.b16 %v1048, %v1044
    %v1317 = vpack.c.b16 %v1053, %v1049
    %v1318 = vpack.c.b16 %v1054, %v1050
    %v1319 = vpack.c.b16 %v1055, %v1051
    %v1320 = vpack.c.b16 %v1056, %v1052
    %v1321 = vpack.c.b16 %v1061, %v1057
    %v1322 = vpack.c.b16 %v1062, %v1058
    %v1323 = vpack.c.b16 %v1063, %v1059
    %v1324 = vpack.c.b16 %v1064, %v1060
    %v1325 = vpack.c.b16 %v1069, %v1065
    %v1326 = vpack.c.b16 %v1070, %v1066
    %v1327 = vpack.c.b16 %v1071, %v1067
    %v1328 = vpack.c.b16 %v1072, %v1068
    %v1329 = vpack.c.b16 %v1077, %v1073
    %v1330 = vpack.c.b16 %v1078, %v1074
    %v1331 = vpack.c.b16 %v1079, %v1075
    %v1332 = vpack.c.b16 %v1080, %v1076
    %v1333 = vpack.c.b16 %v1081, %v1081
    %v1334 = vpack.c.b16 %v1082, %v1082
    %v1335 = vpack.c.b16 %v1083, %v1083
    %v1336 = vpack.c.b16 %v1084, %v1084
    %vm1585 = vcmask 850944
    %v1587 = vsel %vm1585, %v74, 0
    %vm1589 = vcmask 1043456
    %v1591 = vsel %vm1589, %v1333, 0
    %v1594 = vsel %vm1589, %v1334, 0
    %v1597 = vsel %vm1589, %v1335, 0
    %v1600 = vsel %vm1589, %v1336, 0
    %1602 = vmatpush.bf16.msra.mxu0 %v1113
    %1603 = vmatpush.bf16.msra.mxu0 %v1109
    %1604 = vmatpush.bf16.msra.mxu0 %v1105
    %1605 = vmatpush.bf16.msra.mxu0 %v1101
    %1606 = vmatpush.bf16.msra.mxu0 %v1097
    %1607 = vmatpush.bf16.msra.mxu0 %v1093
    %1608 = vmatpush.bf16.msra.mxu0 %v1089
    %1609 = vmatpush.bf16.msra.mxu0 %v1085
    %1610 = vmatmul.bf16.gmra.mxu0 %v67
    %v1611 = vpop.f32.mrf.mxu0
    %v1612 = vadd.f32 %v327, %v1611
    %v1613 = vpop.f32.mrf.mxu0
    %1614 = vdwg.mxu0
    %1615 = vmatpush.bf16.msra.mxu0 %v1145
    %1616 = vmatpush.bf16.msra.mxu0 %v1141
    %1617 = vmatpush.bf16.msra.mxu0 %v1137
    %1618 = vmatpush.bf16.msra.mxu0 %v1133
    %1619 = vmatpush.bf16.msra.mxu0 %v1129
    %1620 = vmatpush.bf16.msra.mxu0 %v1125
    %1621 = vmatpush.bf16.msra.mxu0 %v1121
    %1622 = vmatpush.bf16.msra.mxu0 %v1117
    %1623 = vmatmul.bf16.gmra.mxu0 %v68
    %v1624 = vpop.f32.mrf.mxu0
    %v1625 = vadd.f32 %v1612, %v1624
    %v1626 = vpop.f32.mrf.mxu0
    %1627 = vdwg.mxu0
    %1628 = vmatpush.bf16.msra.mxu0 %v1177
    %1629 = vmatpush.bf16.msra.mxu0 %v1173
    %1630 = vmatpush.bf16.msra.mxu0 %v1169
    %1631 = vmatpush.bf16.msra.mxu0 %v1165
    %1632 = vmatpush.bf16.msra.mxu0 %v1161
    %1633 = vmatpush.bf16.msra.mxu0 %v1157
    %1634 = vmatpush.bf16.msra.mxu0 %v1153
    %1635 = vmatpush.bf16.msra.mxu0 %v1149
    %1636 = vmatmul.bf16.gmra.mxu0 %v69
    %v1637 = vpop.f32.mrf.mxu0
    %v1638 = vadd.f32 %v1625, %v1637
    %v1639 = vpop.f32.mrf.mxu0
    %1640 = vdwg.mxu0
    %1641 = vmatpush.bf16.msra.mxu0 %v1209
    %1642 = vmatpush.bf16.msra.mxu0 %v1205
    %1643 = vmatpush.bf16.msra.mxu0 %v1201
    %1644 = vmatpush.bf16.msra.mxu0 %v1197
    %1645 = vmatpush.bf16.msra.mxu0 %v1193
    %1646 = vmatpush.bf16.msra.mxu0 %v1189
    %1647 = vmatpush.bf16.msra.mxu0 %v1185
    %1648 = vmatpush.bf16.msra.mxu0 %v1181
    %1649 = vmatmul.bf16.gmra.mxu0 %v70
    %v1650 = vpop.f32.mrf.mxu0
    %v1651 = vadd.f32 %v1638, %v1650
    %v1652 = vpop.f32.mrf.mxu0
    %1653 = vdwg.mxu0
    %1654 = vmatpush.bf16.msra.mxu0 %v1241
    %1655 = vmatpush.bf16.msra.mxu0 %v1237
    %1656 = vmatpush.bf16.msra.mxu0 %v1233
    %1657 = vmatpush.bf16.msra.mxu0 %v1229
    %1658 = vmatpush.bf16.msra.mxu0 %v1225
    %1659 = vmatpush.bf16.msra.mxu0 %v1221
    %1660 = vmatpush.bf16.msra.mxu0 %v1217
    %1661 = vmatpush.bf16.msra.mxu0 %v1213
    %1662 = vmatmul.bf16.gmra.mxu0 %v71
    %v1663 = vpop.f32.mrf.mxu0
    %v1664 = vadd.f32 %v1651, %v1663
    %v1665 = vpop.f32.mrf.mxu0
    %1666 = vdwg.mxu0
    %1667 = vmatpush.bf16.msra.mxu0 %v1273
    %1668 = vmatpush.bf16.msra.mxu0 %v1269
    %1669 = vmatpush.bf16.msra.mxu0 %v1265
    %1670 = vmatpush.bf16.msra.mxu0 %v1261
    %1671 = vmatpush.bf16.msra.mxu0 %v1257
    %1672 = vmatpush.bf16.msra.mxu0 %v1253
    %1673 = vmatpush.bf16.msra.mxu0 %v1249
    %1674 = vmatpush.bf16.msra.mxu0 %v1245
    %1675 = vmatmul.bf16.gmra.mxu0 %v72
    %v1676 = vpop.f32.mrf.mxu0
    %v1677 = vadd.f32 %v1664, %v1676
    %v1678 = vpop.f32.mrf.mxu0
    %1679 = vdwg.mxu0
    %1680 = vmatpush.bf16.msra.mxu0 %v1305
    %1681 = vmatpush.bf16.msra.mxu0 %v1301
    %1682 = vmatpush.bf16.msra.mxu0 %v1297
    %1683 = vmatpush.bf16.msra.mxu0 %v1293
    %1684 = vmatpush.bf16.msra.mxu0 %v1289
    %1685 = vmatpush.bf16.msra.mxu0 %v1285
    %1686 = vmatpush.bf16.msra.mxu0 %v1281
    %1687 = vmatpush.bf16.msra.mxu0 %v1277
    %1688 = vmatmul.bf16.gmra.mxu0 %v73
    %v1689 = vpop.f32.mrf.mxu0
    %v1690 = vadd.f32 %v1677, %v1689
    %v1691 = vpop.f32.mrf.mxu0
    %1692 = vdwg.mxu0
    %1693 = vmatpush.bf16.msra.mxu0 0
    %1694 = vmatpush.bf16.msra.mxu0 %v1591
    %1695 = vmatpush.bf16.msra.mxu0 %v1329
    %1696 = vmatpush.bf16.msra.mxu0 %v1325
    %1697 = vmatpush.bf16.msra.mxu0 %v1321
    %1698 = vmatpush.bf16.msra.mxu0 %v1317
    %1699 = vmatpush.bf16.msra.mxu0 %v1313
    %1700 = vmatpush.bf16.msra.mxu0 %v1309
    %1701 = vmatmul.bf16.gmra.mxu0 %v1587
    %v1702 = vpop.f32.mrf.mxu0
    %v1703 = vadd.f32 %v1690, %v1702
    %v1704 = vpop.f32.mrf.mxu0
    %1705 = vdwg.mxu0
    %1706 = vmatpush.bf16.msra.mxu0 %v1114
    %1707 = vmatpush.bf16.msra.mxu0 %v1110
    %1708 = vmatpush.bf16.msra.mxu0 %v1106
    %1709 = vmatpush.bf16.msra.mxu0 %v1102
    %1710 = vmatpush.bf16.msra.mxu0 %v1098
    %1711 = vmatpush.bf16.msra.mxu0 %v1094
    %1712 = vmatpush.bf16.msra.mxu0 %v1090
    %1713 = vmatpush.bf16.msra.mxu0 %v1086
    %1714 = vmatmul.bf16.gmra.mxu0 %v67
    %v1715 = vpop.f32.mrf.mxu0
    %v1716 = vadd.f32 %v328, %v1715
    %v1717 = vpop.f32.mrf.mxu0
    %1718 = vdwg.mxu0
    %1719 = vmatpush.bf16.msra.mxu0 %v1146
    %1720 = vmatpush.bf16.msra.mxu0 %v1142
    %1721 = vmatpush.bf16.msra.mxu0 %v1138
    %1722 = vmatpush.bf16.msra.mxu0 %v1134
    %1723 = vmatpush.bf16.msra.mxu0 %v1130
    %1724 = vmatpush.bf16.msra.mxu0 %v1126
    %1725 = vmatpush.bf16.msra.mxu0 %v1122
    %1726 = vmatpush.bf16.msra.mxu0 %v1118
    %1727 = vmatmul.bf16.gmra.mxu0 %v68
    %v1728 = vpop.f32.mrf.mxu0
    %v1729 = vadd.f32 %v1716, %v1728
    %v1730 = vpop.f32.mrf.mxu0
    %1731 = vdwg.mxu0
    %1732 = vmatpush.bf16.msra.mxu0 %v1178
    %1733 = vmatpush.bf16.msra.mxu0 %v1174
    %1734 = vmatpush.bf16.msra.mxu0 %v1170
    %1735 = vmatpush.bf16.msra.mxu0 %v1166
    %1736 = vmatpush.bf16.msra.mxu0 %v1162
    %1737 = vmatpush.bf16.msra.mxu0 %v1158
    %1738 = vmatpush.bf16.msra.mxu0 %v1154
    %1739 = vmatpush.bf16.msra.mxu0 %v1150
    %1740 = vmatmul.bf16.gmra.mxu0 %v69
    %v1741 = vpop.f32.mrf.mxu0
    %v1742 = vadd.f32 %v1729, %v1741
    %v1743 = vpop.f32.mrf.mxu0
    %1744 = vdwg.mxu0
    %1745 = vmatpush.bf16.msra.mxu0 %v1210
    %1746 = vmatpush.bf16.msra.mxu0 %v1206
    %1747 = vmatpush.bf16.msra.mxu0 %v1202
    %1748 = vmatpush.bf16.msra.mxu0 %v1198
    %1749 = vmatpush.bf16.msra.mxu0 %v1194
    %1750 = vmatpush.bf16.msra.mxu0 %v1190
    %1751 = vmatpush.bf16.msra.mxu0 %v1186
    %1752 = vmatpush.bf16.msra.mxu0 %v1182
    %1753 = vmatmul.bf16.gmra.mxu0 %v70
    %v1754 = vpop.f32.mrf.mxu0
    %v1755 = vadd.f32 %v1742, %v1754
    %v1756 = vpop.f32.mrf.mxu0
    %1757 = vdwg.mxu0
    %1758 = vmatpush.bf16.msra.mxu0 %v1242
    %1759 = vmatpush.bf16.msra.mxu0 %v1238
    %1760 = vmatpush.bf16.msra.mxu0 %v1234
    %1761 = vmatpush.bf16.msra.mxu0 %v1230
    %1762 = vmatpush.bf16.msra.mxu0 %v1226
    %1763 = vmatpush.bf16.msra.mxu0 %v1222
    %1764 = vmatpush.bf16.msra.mxu0 %v1218
    %1765 = vmatpush.bf16.msra.mxu0 %v1214
    %1766 = vmatmul.bf16.gmra.mxu0 %v71
    %v1767 = vpop.f32.mrf.mxu0
    %v1768 = vadd.f32 %v1755, %v1767
    %v1769 = vpop.f32.mrf.mxu0
    %1770 = vdwg.mxu0
    %1771 = vmatpush.bf16.msra.mxu0 %v1274
    %1772 = vmatpush.bf16.msra.mxu0 %v1270
    %1773 = vmatpush.bf16.msra.mxu0 %v1266
    %1774 = vmatpush.bf16.msra.mxu0 %v1262
    %1775 = vmatpush.bf16.msra.mxu0 %v1258
    %1776 = vmatpush.bf16.msra.mxu0 %v1254
    %1777 = vmatpush.bf16.msra.mxu0 %v1250
    %1778 = vmatpush.bf16.msra.mxu0 %v1246
    %1779 = vmatmul.bf16.gmra.mxu0 %v72
    %v1780 = vpop.f32.mrf.mxu0
    %v1781 = vadd.f32 %v1768, %v1780
    %v1782 = vpop.f32.mrf.mxu0
    %1783 = vdwg.mxu0
    %1784 = vmatpush.bf16.msra.mxu0 %v1306
    %1785 = vmatpush.bf16.msra.mxu0 %v1302
    %1786 = vmatpush.bf16.msra.mxu0 %v1298
    %1787 = vmatpush.bf16.msra.mxu0 %v1294
    %1788 = vmatpush.bf16.msra.mxu0 %v1290
    %1789 = vmatpush.bf16.msra.mxu0 %v1286
    %1790 = vmatpush.bf16.msra.mxu0 %v1282
    %1791 = vmatpush.bf16.msra.mxu0 %v1278
    %1792 = vmatmul.bf16.gmra.mxu0 %v73
    %v1793 = vpop.f32.mrf.mxu0
    %v1794 = vadd.f32 %v1781, %v1793
    %v1795 = vpop.f32.mrf.mxu0
    %1796 = vdwg.mxu0
    %1797 = vmatpush.bf16.msra.mxu0 0
    %1798 = vmatpush.bf16.msra.mxu0 %v1594
    %1799 = vmatpush.bf16.msra.mxu0 %v1330
    %1800 = vmatpush.bf16.msra.mxu0 %v1326
    %1801 = vmatpush.bf16.msra.mxu0 %v1322
    %1802 = vmatpush.bf16.msra.mxu0 %v1318
    %1803 = vmatpush.bf16.msra.mxu0 %v1314
    %1804 = vmatpush.bf16.msra.mxu0 %v1310
    %1805 = vmatmul.bf16.gmra.mxu0 %v1587
    %v1806 = vpop.f32.mrf.mxu0
    %v1807 = vadd.f32 %v1794, %v1806
    %v1808 = vpop.f32.mrf.mxu0
    %1809 = vdwg.mxu0
    %1810 = vmatpush.bf16.msra.mxu0 %v1115
    %1811 = vmatpush.bf16.msra.mxu0 %v1111
    %1812 = vmatpush.bf16.msra.mxu0 %v1107
    %1813 = vmatpush.bf16.msra.mxu0 %v1103
    %1814 = vmatpush.bf16.msra.mxu0 %v1099
    %1815 = vmatpush.bf16.msra.mxu0 %v1095
    %1816 = vmatpush.bf16.msra.mxu0 %v1091
    %1817 = vmatpush.bf16.msra.mxu0 %v1087
    %1818 = vmatmul.bf16.gmra.mxu0 %v67
    %v1819 = vpop.f32.mrf.mxu0
    %v1820 = vadd.f32 %v329, %v1819
    %v1821 = vpop.f32.mrf.mxu0
    %1822 = vdwg.mxu0
    %1823 = vmatpush.bf16.msra.mxu0 %v1147
    %1824 = vmatpush.bf16.msra.mxu0 %v1143
    %1825 = vmatpush.bf16.msra.mxu0 %v1139
    %1826 = vmatpush.bf16.msra.mxu0 %v1135
    %1827 = vmatpush.bf16.msra.mxu0 %v1131
    %1828 = vmatpush.bf16.msra.mxu0 %v1127
    %1829 = vmatpush.bf16.msra.mxu0 %v1123
    %1830 = vmatpush.bf16.msra.mxu0 %v1119
    %1831 = vmatmul.bf16.gmra.mxu0 %v68
    %v1832 = vpop.f32.mrf.mxu0
    %v1833 = vadd.f32 %v1820, %v1832
    %v1834 = vpop.f32.mrf.mxu0
    %1835 = vdwg.mxu0
    %1836 = vmatpush.bf16.msra.mxu0 %v1179
    %1837 = vmatpush.bf16.msra.mxu0 %v1175
    %1838 = vmatpush.bf16.msra.mxu0 %v1171
    %1839 = vmatpush.bf16.msra.mxu0 %v1167
    %1840 = vmatpush.bf16.msra.mxu0 %v1163
    %1841 = vmatpush.bf16.msra.mxu0 %v1159
    %1842 = vmatpush.bf16.msra.mxu0 %v1155
    %1843 = vmatpush.bf16.msra.mxu0 %v1151
    %1844 = vmatmul.bf16.gmra.mxu0 %v69
    %v1845 = vpop.f32.mrf.mxu0
    %v1846 = vadd.f32 %v1833, %v1845
    %v1847 = vpop.f32.mrf.mxu0
    %1848 = vdwg.mxu0
    %1849 = vmatpush.bf16.msra.mxu0 %v1211
    %1850 = vmatpush.bf16.msra.mxu0 %v1207
    %1851 = vmatpush.bf16.msra.mxu0 %v1203
    %1852 = vmatpush.bf16.msra.mxu0 %v1199
    %1853 = vmatpush.bf16.msra.mxu0 %v1195
    %1854 = vmatpush.bf16.msra.mxu0 %v1191
    %1855 = vmatpush.bf16.msra.mxu0 %v1187
    %1856 = vmatpush.bf16.msra.mxu0 %v1183
    %1857 = vmatmul.bf16.gmra.mxu0 %v70
    %v1858 = vpop.f32.mrf.mxu0
    %v1859 = vadd.f32 %v1846, %v1858
    %v1860 = vpop.f32.mrf.mxu0
    %1861 = vdwg.mxu0
    %1862 = vmatpush.bf16.msra.mxu0 %v1243
    %1863 = vmatpush.bf16.msra.mxu0 %v1239
    %1864 = vmatpush.bf16.msra.mxu0 %v1235
    %1865 = vmatpush.bf16.msra.mxu0 %v1231
    %1866 = vmatpush.bf16.msra.mxu0 %v1227
    %1867 = vmatpush.bf16.msra.mxu0 %v1223
    %1868 = vmatpush.bf16.msra.mxu0 %v1219
    %1869 = vmatpush.bf16.msra.mxu0 %v1215
    %1870 = vmatmul.bf16.gmra.mxu0 %v71
    %v1871 = vpop.f32.mrf.mxu0
    %v1872 = vadd.f32 %v1859, %v1871
    %v1873 = vpop.f32.mrf.mxu0
    %1874 = vdwg.mxu0
    %1875 = vmatpush.bf16.msra.mxu0 %v1275
    %1876 = vmatpush.bf16.msra.mxu0 %v1271
    %1877 = vmatpush.bf16.msra.mxu0 %v1267
    %1878 = vmatpush.bf16.msra.mxu0 %v1263
    %1879 = vmatpush.bf16.msra.mxu0 %v1259
    %1880 = vmatpush.bf16.msra.mxu0 %v1255
    %1881 = vmatpush.bf16.msra.mxu0 %v1251
    %1882 = vmatpush.bf16.msra.mxu0 %v1247
    %1883 = vmatmul.bf16.gmra.mxu0 %v72
    %v1884 = vpop.f32.mrf.mxu0
    %v1885 = vadd.f32 %v1872, %v1884
    %v1886 = vpop.f32.mrf.mxu0
    %1887 = vdwg.mxu0
    %1888 = vmatpush.bf16.msra.mxu0 %v1307
    %1889 = vmatpush.bf16.msra.mxu0 %v1303
    %1890 = vmatpush.bf16.msra.mxu0 %v1299
    %1891 = vmatpush.bf16.msra.mxu0 %v1295
    %1892 = vmatpush.bf16.msra.mxu0 %v1291
    %1893 = vmatpush.bf16.msra.mxu0 %v1287
    %1894 = vmatpush.bf16.msra.mxu0 %v1283
    %1895 = vmatpush.bf16.msra.mxu0 %v1279
    %1896 = vmatmul.bf16.gmra.mxu0 %v73
    %v1897 = vpop.f32.mrf.mxu0
    %v1898 = vadd.f32 %v1885, %v1897
    %v1899 = vpop.f32.mrf.mxu0
    %1900 = vdwg.mxu0
    %1901 = vmatpush.bf16.msra.mxu0 0
    %1902 = vmatpush.bf16.msra.mxu0 %v1597
    %1903 = vmatpush.bf16.msra.mxu0 %v1331
    %1904 = vmatpush.bf16.msra.mxu0 %v1327
    %1905 = vmatpush.bf16.msra.mxu0 %v1323
    %1906 = vmatpush.bf16.msra.mxu0 %v1319
    %1907 = vmatpush.bf16.msra.mxu0 %v1315
    %1908 = vmatpush.bf16.msra.mxu0 %v1311
    %1909 = vmatmul.bf16.gmra.mxu0 %v1587
    %v1910 = vpop.f32.mrf.mxu0
    %v1911 = vadd.f32 %v1898, %v1910
    %v1912 = vpop.f32.mrf.mxu0
    %1913 = vdwg.mxu0
    %1914 = vmatpush.bf16.msra.mxu0 %v1116
    %1915 = vmatpush.bf16.msra.mxu0 %v1112
    %1916 = vmatpush.bf16.msra.mxu0 %v1108
    %1917 = vmatpush.bf16.msra.mxu0 %v1104
    %1918 = vmatpush.bf16.msra.mxu0 %v1100
    %1919 = vmatpush.bf16.msra.mxu0 %v1096
    %1920 = vmatpush.bf16.msra.mxu0 %v1092
    %1921 = vmatpush.bf16.msra.mxu0 %v1088
    %1922 = vmatmul.bf16.gmra.mxu0 %v67
    %v1923 = vpop.f32.mrf.mxu0
    %v1924 = vadd.f32 %v330, %v1923
    %v1925 = vpop.f32.mrf.mxu0
    %1926 = vdwg.mxu0
    %1927 = vmatpush.bf16.msra.mxu0 %v1148
    %1928 = vmatpush.bf16.msra.mxu0 %v1144
    %1929 = vmatpush.bf16.msra.mxu0 %v1140
    %1930 = vmatpush.bf16.msra.mxu0 %v1136
    %1931 = vmatpush.bf16.msra.mxu0 %v1132
    %1932 = vmatpush.bf16.msra.mxu0 %v1128
    %1933 = vmatpush.bf16.msra.mxu0 %v1124
    %1934 = vmatpush.bf16.msra.mxu0 %v1120
    %1935 = vmatmul.bf16.gmra.mxu0 %v68
    %v1936 = vpop.f32.mrf.mxu0
    %v1937 = vadd.f32 %v1924, %v1936
    %v1938 = vpop.f32.mrf.mxu0
    %1939 = vdwg.mxu0
    %1940 = vmatpush.bf16.msra.mxu0 %v1180
    %1941 = vmatpush.bf16.msra.mxu0 %v1176
    %1942 = vmatpush.bf16.msra.mxu0 %v1172
    %1943 = vmatpush.bf16.msra.mxu0 %v1168
    %1944 = vmatpush.bf16.msra.mxu0 %v1164
    %1945 = vmatpush.bf16.msra.mxu0 %v1160
    %1946 = vmatpush.bf16.msra.mxu0 %v1156
    %1947 = vmatpush.bf16.msra.mxu0 %v1152
    %1948 = vmatmul.bf16.gmra.mxu0 %v69
    %v1949 = vpop.f32.mrf.mxu0
    %v1950 = vadd.f32 %v1937, %v1949
    %v1951 = vpop.f32.mrf.mxu0
    %1952 = vdwg.mxu0
    %1953 = vmatpush.bf16.msra.mxu0 %v1212
    %1954 = vmatpush.bf16.msra.mxu0 %v1208
    %1955 = vmatpush.bf16.msra.mxu0 %v1204
    %1956 = vmatpush.bf16.msra.mxu0 %v1200
    %1957 = vmatpush.bf16.msra.mxu0 %v1196
    %1958 = vmatpush.bf16.msra.mxu0 %v1192
    %1959 = vmatpush.bf16.msra.mxu0 %v1188
    %1960 = vmatpush.bf16.msra.mxu0 %v1184
    %1961 = vmatmul.bf16.gmra.mxu0 %v70
    %v1962 = vpop.f32.mrf.mxu0
    %v1963 = vadd.f32 %v1950, %v1962
    %v1964 = vpop.f32.mrf.mxu0
    %1965 = vdwg.mxu0
    %1966 = vmatpush.bf16.msra.mxu0 %v1244
    %1967 = vmatpush.bf16.msra.mxu0 %v1240
    %1968 = vmatpush.bf16.msra.mxu0 %v1236
    %1969 = vmatpush.bf16.msra.mxu0 %v1232
    %1970 = vmatpush.bf16.msra.mxu0 %v1228
    %1971 = vmatpush.bf16.msra.mxu0 %v1224
    %1972 = vmatpush.bf16.msra.mxu0 %v1220
    %1973 = vmatpush.bf16.msra.mxu0 %v1216
    %1974 = vmatmul.bf16.gmra.mxu0 %v71
    %v1975 = vpop.f32.mrf.mxu0
    %v1976 = vadd.f32 %v1963, %v1975
    %v1977 = vpop.f32.mrf.mxu0
    %1978 = vdwg.mxu0
    %1979 = vmatpush.bf16.msra.mxu0 %v1276
    %1980 = vmatpush.bf16.msra.mxu0 %v1272
    %1981 = vmatpush.bf16.msra.mxu0 %v1268
    %1982 = vmatpush.bf16.msra.mxu0 %v1264
    %1983 = vmatpush.bf16.msra.mxu0 %v1260
    %1984 = vmatpush.bf16.msra.mxu0 %v1256
    %1985 = vmatpush.bf16.msra.mxu0 %v1252
    %1986 = vmatpush.bf16.msra.mxu0 %v1248
    %1987 = vmatmul.bf16.gmra.mxu0 %v72
    %v1988 = vpop.f32.mrf.mxu0
    %v1989 = vadd.f32 %v1976, %v1988
    %v1990 = vpop.f32.mrf.mxu0
    %1991 = vdwg.mxu0
    %1992 = vmatpush.bf16.msra.mxu0 %v1308
    %1993 = vmatpush.bf16.msra.mxu0 %v1304
    %1994 = vmatpush.bf16.msra.mxu0 %v1300
    %1995 = vmatpush.bf16.msra.mxu0 %v1296
    %1996 = vmatpush.bf16.msra.mxu0 %v1292
    %1997 = vmatpush.bf16.msra.mxu0 %v1288
    %1998 = vmatpush.bf16.msra.mxu0 %v1284
    %1999 = vmatpush.bf16.msra.mxu0 %v1280
    %2000 = vmatmul.bf16.gmra.mxu0 %v73
    %v2001 = vpop.f32.mrf.mxu0
    %v2002 = vadd.f32 %v1989, %v2001
    %v2003 = vpop.f32.mrf.mxu0
    %2004 = vdwg.mxu0
    %2005 = vmatpush.bf16.msra.mxu0 0
    %2006 = vmatpush.bf16.msra.mxu0 %v1600
    %2007 = vmatpush.bf16.msra.mxu0 %v1332
    %2008 = vmatpush.bf16.msra.mxu0 %v1328
    %2009 = vmatpush.bf16.msra.mxu0 %v1324
    %2010 = vmatpush.bf16.msra.mxu0 %v1320
    %2011 = vmatpush.bf16.msra.mxu0 %v1316
    %2012 = vmatpush.bf16.msra.mxu0 %v1312
    %2013 = vmatmul.bf16.gmra.mxu0 %v1587
    %v2014 = vpop.f32.mrf.mxu0
    %v2015 = vadd.f32 %v2002, %v2014
    %v2016 = vpop.f32.mrf.mxu0
    %2017 = vdwg.mxu0
    %2018 = vst [vmem:[#allocation8] sm:$0xff] %v1703
    %2019 = vst [vmem:[#allocation8 + $0x8] sm:$0xff] %v1807
    %2020 = vst [vmem:[#allocation8 + $0x10] sm:$0xff] %v1911
    %vm2021 = vcmask 949248
    %2022 = vst.msk [vmem:[#allocation8 + $0x18] sm:$0xff] %vm2021, %v2015
    // Predicated region
    $region26: #{small_model_forward.1} parent=1 // pred_check
      _
    $region27: #{small_model_forward.1} parent=1 // pred_check_branch
      %2024 = sbr.rel (0) target = $region29
    $region28: #{small_model_forward.1} parent=1 // pred_region
      %2026 = vsyncadd [#allocation4], 0
      %s2028 = sshll.u32 [#allocation8], 4
      %s2029 = int_to_ptr.vmem [resolvable:$true] %s2028
      %s2030 = sshll.u32 %s3, 4
      %s2031 = int_to_ptr.hbm [resolvable:$true] %s2030
      %2033 = dma.vmem_to_hbm [thread:$0]  %s2029, 512, %s2031, [#allocation4]
    $region29: #{small_model_forward.1} parent=1 // pred_fallthru
      _
    // Predicated region
    $region30: #{small_model_forward.1} parent=1 // pred_check
      _
    $region31: #{small_model_forward.1} parent=1 // pred_check_branch
      %2035 = sbr.rel (0) target = $region33
    $region32: #{small_model_forward.1} parent=1 // pred_region
      %2037 = dma.done [#allocation4], 512
    $region33: #{small_model_forward.1} parent=1 // pred_fallthru
      _
    %2038 = vsyncpa [#allocation3], 1
    %2039 = vsyncpa [#allocation6], 1
    %2040 = vsyncpa [#allocation4], 1

</llo_original>
